<compile_context>
chip_gen: v6e
topology: v6e:2x2x1
jax: 0.10.0
libtpu: 0.0.40
codegen_flags: <defaults>
</compile_context>

<pallas_src>
import functools

import jax
import jax.numpy as jnp
from jax.experimental import pallas as pl
from jax.experimental.pallas import tpu as pltpu


def _round_up(x, m):
    return (x + m - 1) // m * m


def _pad_axis(a, axis, target):
    cur = a.shape[axis]
    if cur == target:
        return a
    pads = [(0, 0)] * a.ndim
    pads[axis] = (0, target - cur)
    return jnp.pad(a, pads)


# ----------------------------------------------------------------------------
# Layout glue (XLA): transposed conv -> im2col matmul operands
# ----------------------------------------------------------------------------
def _im2col_for_convT(x_nhwc, k, stride, padding):
    """Zero-dilate + pad + extract kxk patches.  Returns ((M, k*k*Cin), Ho, Wo, M)."""
    N, H, W, Cin = x_nhwc.shape
    s = stride
    Hd, Wd = (H - 1) * s + 1, (W - 1) * s + 1
    if s > 1:
        xd = jnp.zeros((N, Hd, Wd, Cin), x_nhwc.dtype).at[:, ::s, ::s, :].set(x_nhwc)
    else:
        xd = x_nhwc
    pad = k - 1 - padding
    xp = jnp.pad(xd, ((0, 0), (pad, pad), (pad, pad), (0, 0)))
    Ho = Hd + 2 * pad - (k - 1)
    Wo = Wd + 2 * pad - (k - 1)
    if k == 1:
        pat = xp[:, :, :, None, :]
    else:
        pat = jnp.stack(
            [xp[:, a:a + Ho, b:b + Wo, :] for a in range(k) for b in range(k)], axis=3)
    M = N * Ho * Wo
    return pat.reshape(M, k * k * Cin), Ho, Wo, M


def _convT_weight_as_matmul(w):
    """(Cin, Cout, k, k) PyTorch ConvTranspose2d weight -> (k*k*Cin, Cout).

    Transposed conv == ordinary conv on the zero-dilated, padded input with the
    spatially flipped kernel and swapped in/out channels.
    """
    Cin, Cout, k, _ = w.shape
    wf = w[:, :, ::-1, ::-1]
    return jnp.transpose(wf, (2, 3, 0, 1)).reshape(k * k * Cin, Cout)


# ----------------------------------------------------------------------------
# Kernel 1: (M, K)@(K, TN) matmul + training-mode BatchNorm + ReLU, channel-tiled
# ----------------------------------------------------------------------------
def _matmul_bn_relu_kernel(x_ref, w_ref, g_ref, b_ref, o_ref, *, inv_m, eps):
    # x: (Mp, K) bf16, w: (K, TN) bf16, g/b: (1, TN) f32, o: (Mp, TN) f32
    y = jnp.dot(x_ref[...], w_ref[...], preferred_element_type=jnp.float32)
    # sum / sum-of-squares so zero-padded rows (M padding) don't bias the stats.
    s1 = jnp.sum(y, axis=0, keepdims=True)
    s2 = jnp.sum(y * y, axis=0, keepdims=True)
    mean = s1 * inv_m
    var = jnp.maximum(s2 * inv_m - mean * mean, 0.0)     # biased batch variance
    yhat = (y - mean) * jax.lax.rsqrt(var + eps)
    o_ref[...] = jnp.maximum(yhat * g_ref[...] + b_ref[...], 0.0)


def matmul_bn_relu(pat2d, w2d, gamma, beta, *, eps=1e-3, tn=128):
    """relu(BN_train(pat2d @ w2d)) with lane/sublane padding; returns (M, Cp)."""
    M, K = pat2d.shape
    Cout = w2d.shape[1]
    Mp = _round_up(M, 8)
    Cp = _round_up(Cout, tn)          # tn=128: lane-dense and >=2 parallel steps (v7x)

    a = _pad_axis(pat2d, 0, Mp).astype(jnp.bfloat16)
    w = _pad_axis(w2d, 1, Cp).astype(jnp.bfloat16)
    g = _pad_axis(gamma.reshape(1, Cout).astype(jnp.float32), 1, Cp)
    b = _pad_axis(beta.reshape(1, Cout).astype(jnp.float32), 1, Cp)

    kernel = functools.partial(_matmul_bn_relu_kernel, inv_m=1.0 / M, eps=eps)
    out = pl.pallas_call(
        kernel,
        out_shape=jax.ShapeDtypeStruct((Mp, Cp), jnp.float32),
        grid=(Cp // tn,),
        in_specs=[
            pl.BlockSpec((Mp, K), lambda j: (0, 0)),
            pl.BlockSpec((K, tn), lambda j: (0, j)),
            pl.BlockSpec((1, tn), lambda j: (0, j)),
            pl.BlockSpec((1, tn), lambda j: (0, j)),
        ],
        out_specs=pl.BlockSpec((Mp, tn), lambda j: (0, j)),
        compiler_params=pltpu.CompilerParams(dimension_semantics=("parallel",)),
    )(a, w, g, b)
    return out[:M]                    # caller slices channels


# ----------------------------------------------------------------------------
# Kernel 2: two fused stages:  (3x3 ConvT as matmul)+BN+ReLU  ->  (1x1 ConvT)+BN+ReLU
# ----------------------------------------------------------------------------
def _matmul_bn_relu_x2_kernel(x_ref, w1_ref, g1_ref, b1_ref,
                              w2_ref, g2_ref, b2_ref, o_ref, *, inv_m, m_real, eps):
    # stage 1
    y1 = jnp.dot(x_ref[...], w1_ref[...], preferred_element_type=jnp.float32)
    s1 = jnp.sum(y1, axis=0, keepdims=True)
    q1 = jnp.sum(y1 * y1, axis=0, keepdims=True)
    mean1 = s1 * inv_m
    var1 = jnp.maximum(q1 * inv_m - mean1 * mean1, 0.0)
    h = jnp.maximum((y1 - mean1) * jax.lax.rsqrt(var1 + eps) * g1_ref[...] + b1_ref[...], 0.0)
    # zero the M-padding rows so stage-2 batch statistics stay exact
    row = jax.lax.broadcasted_iota(jnp.int32, h.shape, 0)
    h = jnp.where(row < m_real, h, 0.0)
    # stage 2 (1x1 transposed conv == plain matmul on the same (M, C) layout)
    y2 = jnp.dot(h.astype(jnp.bfloat16), w2_ref[...], preferred_element_type=jnp.float32)
    s2 = jnp.sum(y2, axis=0, keepdims=True)
    q2 = jnp.sum(y2 * y2, axis=0, keepdims=True)
    mean2 = s2 * inv_m
    var2 = jnp.maximum(q2 * inv_m - mean2 * mean2, 0.0)
    o_ref[...] = jnp.maximum(
        (y2 - mean2) * jax.lax.rsqrt(var2 + eps) * g2_ref[...] + b2_ref[...], 0.0)


def matmul_bn_relu_x2(pat2d, w1, g1, b1, w2, g2, b2, *, eps=1e-3):
    M, K = pat2d.shape
    C1, C2 = w1.shape[1], w2.shape[1]
    Mp = _round_up(M, 8)
    C1p = _round_up(C1, 128)
    C2p = _round_up(C2, 128)

    a = _pad_axis(pat2d, 0, Mp).astype(jnp.bfloat16)
    w1p = _pad_axis(w1, 1, C1p).astype(jnp.bfloat16)
    g1p = _pad_axis(g1.reshape(1, C1).astype(jnp.float32), 1, C1p)
    b1p = _pad_axis(b1.reshape(1, C1).astype(jnp.float32), 1, C1p)
    w2p = _pad_axis(_pad_axis(w2, 0, C1p), 1, C2p).astype(jnp.bfloat16)
    g2p = _pad_axis(g2.reshape(1, C2).astype(jnp.float32), 1, C2p)
    b2p = _pad_axis(b2.reshape(1, C2).astype(jnp.float32), 1, C2p)

    kernel = functools.partial(_matmul_bn_relu_x2_kernel,
                               inv_m=1.0 / M, m_real=M, eps=eps)
    out = pl.pallas_call(
        kernel,
        out_shape=jax.ShapeDtypeStruct((Mp, C2p), jnp.float32),
        grid=(1,),
        in_specs=[
            pl.BlockSpec((Mp, K), lambda j: (0, 0)),
            pl.BlockSpec((K, C1p), lambda j: (0, 0)),
            pl.BlockSpec((1, C1p), lambda j: (0, 0)),
            pl.BlockSpec((1, C1p), lambda j: (0, 0)),
            pl.BlockSpec((C1p, C2p), lambda j: (0, 0)),
            pl.BlockSpec((1, C2p), lambda j: (0, 0)),
            pl.BlockSpec((1, C2p), lambda j: (0, 0)),
        ],
        out_specs=pl.BlockSpec((Mp, C2p), lambda j: (0, 0)),
        compiler_params=pltpu.CompilerParams(dimension_semantics=("arbitrary",)),
    )(a, w1p, g1p, b1p, w2p, g2p, b2p)
    return out[:M, :C2]


# ----------------------------------------------------------------------------
# MaxUnpool2d kernel: vectorized compare-reduce against a lane iota
# ----------------------------------------------------------------------------
def _max_unpool_kernel(x_ref, idx_ref, o_ref):
    # x/idx: (1, C, P), o: (1, C, Lp)  (Lp lane-dense multiple of 128)
    x = x_ref[0]                                   # (C, P)
    idx = idx_ref[0]                               # (C, P) int32
    C, P = x.shape
    Lp = o_ref.shape[2]
    lane = jax.lax.broadcasted_iota(jnp.int32, (C, P, Lp), 2)
    hit = lane == idx[:, :, None]
    # TODO(synk): duplicate indices sum contributions here; torch MaxUnpool2d
    # behavior for duplicates is an unspecified overwrite (and torch errors on
    # out-of-range indices, which are silently dropped here).
    o_ref[0] = jnp.sum(jnp.where(hit, x[:, :, None], 0.0), axis=1)


def max_unpool2d(x_nchw, indices, *, kernel_size=3, stride=2):
    N, C, H, W = x_nchw.shape
    Hout = (H - 1) * stride + kernel_size
    Wout = (W - 1) * stride + kernel_size
    P, L = H * W, Hout * Wout
    Lp = _round_up(L, 128)
    xf = x_nchw.reshape(N, C, P).astype(jnp.float32)
    idxf = indices.reshape(N, C, P).astype(jnp.int32)
    out = pl.pallas_call(
        _max_unpool_kernel,
        out_shape=jax.ShapeDtypeStruct((N, C, Lp), jnp.float32),
        grid=(N,),
        in_specs=[
            pl.BlockSpec((1, C, P), lambda n: (n, 0, 0)),
            pl.BlockSpec((1, C, P), lambda n: (n, 0, 0)),
        ],
        out_specs=pl.BlockSpec((1, C, Lp), lambda n: (n, 0, 0)),
        compiler_params=pltpu.CompilerParams(dimension_semantics=("parallel",)),
    )(xf, idxf)
    return out[:, :, :L].reshape(N, C, Hout, Wout)


# ----------------------------------------------------------------------------
# InceptionTransposeBlockB forward
# ----------------------------------------------------------------------------
def inception_transpose_block_b(x_nchw, indices, params):
    N, Cin, H, W = x_nchw.shape
    x_nhwc = jnp.transpose(x_nchw, (0, 2, 3, 1)).astype(jnp.float32)

    # ---- branch3x3 (Cout=384) + branch3x3dbl_3 (Cout=96): one fused call ----
    # Both are ConvT(k=3, s=2, p=0) on x -> identical im2col input.
    pat, Ho, Wo, M = _im2col_for_convT(x_nhwc, k=3, stride=2, padding=0)
    w_a = _convT_weight_as_matmul(params["w_3x3"])          # (K, 384)
    w_b = _convT_weight_as_matmul(params["w_dbl3"])         # (K, 96)
    w_ab = jnp.concatenate([w_a, w_b], axis=1)              # (K, 480) -> pad 512
    g_ab = jnp.concatenate([params["g_3x3"], params["g_dbl3"]])
    b_ab = jnp.concatenate([params["b_3x3"], params["b_dbl3"]])
    fused = matmul_bn_relu(pat, w_ab, g_ab, b_ab)            # (M, 512)
    b3 = fused[:, :384].reshape(N, Ho, Wo, 384)
    d3 = fused[:, 384:480].reshape(N, Ho, Wo, 96)

    # ---- branch3x3dbl_2 (3x3, p=1) fused with branch3x3dbl_1 (1x1) ----------
    pat_d, Ho2, Wo2, M2 = _im2col_for_convT(d3, k=3, stride=1, padding=1)
    w_d2 = _convT_weight_as_matmul(params["w_dbl2"])         # (864, 96)
    w_d1 = _convT_weight_as_matmul(params["w_dbl1"])         # (96, 64)
    dbl = matmul_bn_relu_x2(pat_d, w_d2, params["g_dbl2"], params["b_dbl2"],
                            w_d1, params["g_dbl1"], params["b_dbl1"])
    dbl = dbl.reshape(N, Ho2, Wo2, 64)

    # ---- branch_unpool: MaxUnpool2d(kernel_size=3, stride=2) ----------------
    unp = max_unpool2d(x_nchw, indices, kernel_size=3, stride=2)   # NCHW
    unp_nhwc = jnp.transpose(unp, (0, 2, 3, 1))

    # Channel concat on the NHWC lane axis, single NHWC->NCHW transpose at the end.
    out_nhwc = jnp.concatenate([b3, dbl, unp_nhwc], axis=-1)
    return jnp.transpose(out_nhwc, (0, 3, 1, 2))


if __name__ == "__main__":
    N, C_in, H, W = 2, 16, 8, 8
    key = jax.random.PRNGKey(0)
    kx, kh, kw_, k1, k2, k3, k4 = jax.random.split(key, 7)

    x = jax.random.normal(kx, (N, C_in, H, W), jnp.float32)

    # valid, collision-free MaxUnpool indices for kernel_size=3, stride=2:
    # within window (h, w) pick element at (2h+dh, 2w+dw), dh/dw in {0, 1}.
    Hout, Wout = 2 * H + 1, 2 * W + 1
    dh = jax.random.randint(kh, (N, C_in, H, W), 0, 2)
    dw = jax.random.randint(kw_, (N, C_in, H, W), 0, 2)
    oh = 2 * jnp.arange(H)[None, None, :, None] + dh
    ow = 2 * jnp.arange(W)[None, None, None, :] + dw
    indices = (oh * Wout + ow).astype(jnp.int32)

    params = {
        "w_3x3": 0.05 * jax.random.normal(k1, (C_in, 384, 3, 3), jnp.float32),
        "g_3x3": jnp.ones((384,), jnp.float32),
        "b_3x3": jnp.zeros((384,), jnp.float32),
        "w_dbl3": 0.05 * jax.random.normal(k2, (C_in, 96, 3, 3), jnp.float32),
        "g_dbl3": jnp.ones((96,), jnp.float32),
        "b_dbl3": jnp.zeros((96,), jnp.float32),
        "w_dbl2": 0.05 * jax.random.normal(k3, (96, 96, 3, 3), jnp.float32),
        "g_dbl2": jnp.ones((96,), jnp.float32),
        "b_dbl2": jnp.zeros((96,), jnp.float32),
        "w_dbl1": 0.05 * jax.random.normal(k4, (96, 64, 1, 1), jnp.float32),
        "g_dbl1": jnp.ones((64,), jnp.float32),
        "b_dbl1": jnp.zeros((64,), jnp.float32),
    }

    out = jax.block_until_ready(inception_transpose_block_b(x, indices, params))

    assert out.shape == (N, 384 + 64 + C_in, Hout, Wout), out.shape
    assert bool(jnp.all(jnp.isfinite(out)))

    # sanity: gathering the unpool branch back at `indices` recovers x exactly
    unp_branch = out[:, 384 + 64:, :, :].reshape(N, C_in, Hout * Wout)
    gathered = jnp.take_along_axis(unp_branch, indices.reshape(N, C_in, H * W), axis=2)
    assert bool(jnp.allclose(gathered, x.reshape(N, C_in, H * W), atol=1e-6))

    print("KERNEL_OK")
</pallas_src>

<mosaic_0001>
module attributes {stable_mosaic.version = 11 : i64} {
  func.func @_matmul_bn_relu_kernel(%arg0: i32, %arg1: memref<584x144xbf16, #tpu.memory_space<vmem>>, %arg2: memref<144x128xbf16, #tpu.memory_space<vmem>>, %arg3: memref<1x128xf32, #tpu.memory_space<vmem>>, %arg4: memref<1x128xf32, #tpu.memory_space<vmem>>, %arg5: memref<584x128xf32, #tpu.memory_space<vmem>>) attributes {dimension_semantics = [#tpu.dimension_semantics<parallel>], iteration_bounds = array<i64: 4>, scalar_prefetch = 0 : i64, scratch_operands = 0 : i64, tpu.core_type = #tpu.core_type<tc>, window_params = [{pipeline_mode = #tpu.pipeline_mode<synchronous>, transform_indices = @transform_0, window_bounds = array<i64: 584, 144>}, {transform_indices = @transform_1, window_bounds = array<i64: 144, 128>}, {transform_indices = @transform_2, window_bounds = array<i64: 1, 128>}, {transform_indices = @transform_3, window_bounds = array<i64: 1, 128>}, {transform_indices = @transform_4, window_bounds = array<i64: 584, 128>}]} {
    %c0 = arith.constant 0 : index
    %c0_0 = arith.constant 0 : index
    %0 = vector.load %arg1[%c0, %c0_0] : memref<584x144xbf16, #tpu.memory_space<vmem>>, vector<584x144xbf16>
    %c0_1 = arith.constant 0 : index
    %c0_2 = arith.constant 0 : index
    %1 = vector.load %arg2[%c0_1, %c0_2] : memref<144x128xbf16, #tpu.memory_space<vmem>>, vector<144x128xbf16>
    %cst = arith.constant dense<0.000000e+00> : vector<584x128xf32>
    %2 = tpu.matmul %0, %1, %cst {dimension_numbers = #tpu.dot_dimension_numbers<[1], [0], [0], [1], [0, 0, 1, 1], [], []>} : vector<584x144xbf16>, vector<144x128xbf16>, vector<584x128xf32> -> vector<584x128xf32>
    %cst_3 = arith.constant dense<0.000000e+00> : vector<128xf32>
    %3 = vector.multi_reduction <add>, %2, %cst_3 [0] : vector<584x128xf32> to vector<128xf32>
    %4 = vector.shape_cast %3 : vector<128xf32> to vector<1x128xf32>
    %5 = arith.mulf %2, %2 : vector<584x128xf32>
    %cst_4 = arith.constant dense<0.000000e+00> : vector<128xf32>
    %6 = vector.multi_reduction <add>, %5, %cst_4 [0] : vector<584x128xf32> to vector<128xf32>
    %7 = vector.shape_cast %6 : vector<128xf32> to vector<1x128xf32>
    %cst_5 = arith.constant 0.00173010386 : f32
    %8 = vector.broadcast %cst_5 : f32 to vector<1x128xf32>
    %9 = arith.mulf %4, %8 : vector<1x128xf32>
    %cst_6 = arith.constant 0.00173010386 : f32
    %10 = vector.broadcast %cst_6 : f32 to vector<1x128xf32>
    %11 = arith.mulf %7, %10 : vector<1x128xf32>
    %12 = arith.mulf %9, %9 : vector<1x128xf32>
    %13 = arith.subf %11, %12 : vector<1x128xf32>
    %cst_7 = arith.constant 0.000000e+00 : f32
    %14 = vector.broadcast %cst_7 : f32 to vector<1x128xf32>
    %15 = arith.maximumf %13, %14 : vector<1x128xf32>
    %16 = vector.broadcast %9 : vector<1x128xf32> to vector<584x128xf32>
    %17 = arith.subf %2, %16 : vector<584x128xf32>
    %cst_8 = arith.constant 1.000000e-03 : f32
    %18 = vector.broadcast %cst_8 : f32 to vector<1x128xf32>
    %19 = arith.addf %15, %18 : vector<1x128xf32>
    %20 = math.rsqrt %19 : vector<1x128xf32>
    %21 = vector.broadcast %20 : vector<1x128xf32> to vector<584x128xf32>
    %22 = arith.mulf %17, %21 : vector<584x128xf32>
    %c0_9 = arith.constant 0 : index
    %c0_10 = arith.constant 0 : index
    %23 = vector.load %arg3[%c0_9, %c0_10] : memref<1x128xf32, #tpu.memory_space<vmem>>, vector<1x128xf32>
    %24 = vector.broadcast %23 : vector<1x128xf32> to vector<584x128xf32>
    %25 = arith.mulf %22, %24 : vector<584x128xf32>
    %c0_11 = arith.constant 0 : index
    %c0_12 = arith.constant 0 : index
    %26 = vector.load %arg4[%c0_11, %c0_12] : memref<1x128xf32, #tpu.memory_space<vmem>>, vector<1x128xf32>
    %27 = vector.broadcast %26 : vector<1x128xf32> to vector<584x128xf32>
    %28 = arith.addf %25, %27 : vector<584x128xf32>
    %cst_13 = arith.constant 0.000000e+00 : f32
    %29 = vector.broadcast %cst_13 : f32 to vector<584x128xf32>
    %30 = arith.maximumf %28, %29 : vector<584x128xf32>
    %c0_14 = arith.constant 0 : index
    %c0_15 = arith.constant 0 : index
    %31 = vector.load %arg5[%c0_14, %c0_15] : memref<584x128xf32, #tpu.memory_space<vmem>>, vector<584x128xf32>
    tpu.vector_store %arg5[%c0_14, %c0_15], %30 {strides = array<i32>} : memref<584x128xf32, #tpu.memory_space<vmem>>, vector<584x128xf32>,
    return
  }
  func.func @transform_0(%arg0: i32) -> (i32, i32) {
    %c0_i32 = arith.constant 0 : i32
    %c0_i32_0 = arith.constant 0 : i32
    %c0_i32_1 = arith.constant 0 : i32
    return %c0_i32, %c0_i32_0 : i32, i32
  }
  func.func @transform_1(%arg0: i32) -> (i32, i32) {
    %c0_i32 = arith.constant 0 : i32
    %c0_i32_0 = arith.constant 0 : i32
    return %c0_i32, %arg0 : i32, i32
  }
  func.func @transform_2(%arg0: i32) -> (i32, i32) {
    %c0_i32 = arith.constant 0 : i32
    %c0_i32_0 = arith.constant 0 : i32
    return %c0_i32, %arg0 : i32, i32
  }
  func.func @transform_3(%arg0: i32) -> (i32, i32) {
    %c0_i32 = arith.constant 0 : i32
    %c0_i32_0 = arith.constant 0 : i32
    return %c0_i32, %arg0 : i32, i32
  }
  func.func @transform_4(%arg0: i32) -> (i32, i32) {
    %c0_i32 = arith.constant 0 : i32
    %c0_i32_0 = arith.constant 0 : i32
    return %c0_i32, %arg0 : i32, i32
  }
}

</mosaic_0001>

<llo_original>
// kernel: tpu_custom_call.1
$region0: #{tpu_custom_call.1}
  #allocation0 [shape = 'u32[]', space=smem, size = 0x4, offset = 0x4, fixed_abs, tag = 'smem constant byte address 0x4 - core index']
  #allocation1 [shape = 'u32[144,128]{1,0:T(1,128)}', space=vmem, size = 0x12000, scoped, tag = 'internal scratch']
  %s0 = inlined_call_operand.vmem [shape: bf16[584,144], index: 0, kind: input, shape index: {}]
  %s1 = inlined_call_operand.hbm [shape: bf16[144,512], index: 1, kind: input, shape index: {}]
  %s2 = inlined_call_operand.hbm [shape: f32[1,512], index: 2, kind: input, shape index: {}]
  %s3 = inlined_call_operand.hbm [shape: f32[1,512], index: 3, kind: input, shape index: {}]
  %s4 = inlined_call_operand.hbm [shape: f32[584,512], index: 4, kind: output, shape index: {}]
  %s5 = sld [smem:[#allocation0]]
  $region61: #{tpu_custom_call.1} parent=0
    _
  %s7 = ssub.s32 1, %s5
  %s8 = scalar_select 0, %s7, %s5
  $region1: #{tpu_custom_call.1} parent=0
    #allocation2 [shape = 'u8[73728]{0}', space=vmem, size = 0x12000, scoped, tag = 'input window, operand 1']
    #allocation3 [shape = 's32[2]{0}', space=sflag, size = 0x8, scoped, tag = 'scoped memory for tpu_custom_call.1']
    #allocation4 [shape = 's32[2]{0}', space=sflag, size = 0x8, scoped, tag = 'scoped memory for tpu_custom_call.1']
    #allocation5 [shape = 'u8[1024]{0}', space=vmem, size = 0x400, scoped, tag = 'input window, operand 2']
    #allocation6 [shape = 's32[2]{0}', space=sflag, size = 0x8, scoped, tag = 'scoped memory for tpu_custom_call.1']
    #allocation7 [shape = 'u8[1024]{0}', space=vmem, size = 0x400, scoped, tag = 'input window, operand 3']
    #allocation8 [shape = 'u8[598016]{0}', space=vmem, size = 0x92000, scoped, tag = 'output window, operand 0']
    %9 = vsyncpa [#allocation3], 0
    %s10 = scalar_lea.sflag [#allocation3], 1
    %11 = vsyncpa %s10, 0
    %12 = vsyncpa [#allocation6], 0
    %s13 = scalar_lea.sflag [#allocation6], 1
    %14 = vsyncpa %s13, 0
    %15 = vsyncpa [#allocation4], 0
    %s16 = scalar_lea.sflag [#allocation4], 1
    %17 = vsyncpa %s16, 0
    loop: start=0, step=1, limit=6
    $region2: #{tpu_custom_call.1} parent=1 // loop_pre_header
      _
    $region3: #{tpu_custom_call.1} parent=1 // loop_header
      %s19 = sphi 0, %s23
      %p20 = scmp.ge.s32.totalorder %s19, 6
      %s27 = sphi 0, %s27
      %s29 = sphi 0, %s27
      %s30 = sphi 0, %s29
      %s44 = sphi 0, %s30
      %s50 = sphi 0, %s52
      %s53 = sphi 0, %s50
      %s54 = sphi 0, %s53
      %s70 = sphi 0, %s54
      %s76 = sphi 0, %s78
      %s79 = sphi 0, %s76
      %s80 = sphi 0, %s79
      %s96 = sphi 0, %s80
      %s102 = sphi 0, %s104
      %s105 = sphi 0, %s102
      %s106 = sphi 0, %s105
      %s122 = sphi 0, %s106
      %s128 = sphi 0, %s130
      %s131 = sphi 0, %s128
      %s132 = sphi 0, %s131
      %s148 = sphi 0, %s132
    $region4: #{tpu_custom_call.1} parent=1 // loop_header_branch
      %22 = sbr.rel (%p20) target = $region8
    $region5: #{tpu_custom_call.1} parent=1 // loop_body
      %s24 = ssub.s32 %s19, 1
      %s25 = ssub.s32 %s19, 2
      %s26 = sadd.s32 %s19, 1
      %s28 = sadd.s32 %s27, 1
      %p31 = scmp.eq.s32.totalorder %s19, 3
      %p32 = scmp.ne.s32.totalorder %s27, %s29
      %p33 = scmp.eq.s32.totalorder %s19, 0
      %p34 = por %p32, %p33
      %p35 = scmp.ne.s32.totalorder %s27, %s29
      %p36 = scmp.eq.s32.totalorder %s24, 3
      %p37 = por %p35, %p36
      %p38 = scmp.ne.s32.totalorder %s29, %s30
      %p39 = scmp.eq.s32.totalorder %s24, 0
      %p40 = por %p38, %p39
      %p41 = scmp.ne.s32.totalorder %s29, %s30
      %p42 = scmp.eq.s32.totalorder %s25, 3
      %p43 = por %p41, %p42
      %p45 = scmp.ne.s32.totalorder %s30, %s44
      %p46 = scmp.eq.s32.totalorder %s25, 0
      %p47 = por %p45, %p46
      %s48 = ssub.s32 %s19, %s26
      %p49 = scmp.eq.s32.totalorder %s48, 0
      %s51 = sadd.s32 %s50, 1
      %s52 = scalar_select %p49, %s50, %s51
      %p55 = pneg %p49
      %p56 = scmp.eq.s32.totalorder %s19, 3
      %p57 = por %p55, %p56
      %p58 = scmp.ne.s32.totalorder %s50, %s53
      %p59 = scmp.eq.s32.totalorder %s19, 0
      %p60 = por %p58, %p59
      %p61 = scmp.ne.s32.totalorder %s50, %s53
      %p62 = scmp.eq.s32.totalorder %s24, 3
      %p63 = por %p61, %p62
      %p64 = scmp.ne.s32.totalorder %s53, %s54
      %p65 = scmp.eq.s32.totalorder %s24, 0
      %p66 = por %p64, %p65
      %p67 = scmp.ne.s32.totalorder %s53, %s54
      %p68 = scmp.eq.s32.totalorder %s25, 3
      %p69 = por %p67, %p68
      %p71 = scmp.ne.s32.totalorder %s54, %s70
      %p72 = scmp.eq.s32.totalorder %s25, 0
      %p73 = por %p71, %p72
      %s74 = ssub.s32 %s19, %s26
      %p75 = scmp.eq.s32.totalorder %s74, 0
      %s77 = sadd.s32 %s76, 1
      %s78 = scalar_select %p75, %s76, %s77
      %p81 = pneg %p75
      %p82 = scmp.eq.s32.totalorder %s19, 3
      %p83 = por %p81, %p82
      %p84 = scmp.ne.s32.totalorder %s76, %s79
      %p85 = scmp.eq.s32.totalorder %s19, 0
      %p86 = por %p84, %p85
      %p87 = scmp.ne.s32.totalorder %s76, %s79
      %p88 = scmp.eq.s32.totalorder %s24, 3
      %p89 = por %p87, %p88
      %p90 = scmp.ne.s32.totalorder %s79, %s80
      %p91 = scmp.eq.s32.totalorder %s24, 0
      %p92 = por %p90, %p91
      %p93 = scmp.ne.s32.totalorder %s79, %s80
      %p94 = scmp.eq.s32.totalorder %s25, 3
      %p95 = por %p93, %p94
      %p97 = scmp.ne.s32.totalorder %s80, %s96
      %p98 = scmp.eq.s32.totalorder %s25, 0
      %p99 = por %p97, %p98
      %s100 = ssub.s32 %s19, %s26
      %p101 = scmp.eq.s32.totalorder %s100, 0
      %s103 = sadd.s32 %s102, 1
      %s104 = scalar_select %p101, %s102, %s103
      %p107 = pneg %p101
      %p108 = scmp.eq.s32.totalorder %s19, 3
      %p109 = por %p107, %p108
      %p110 = scmp.ne.s32.totalorder %s102, %s105
      %p111 = scmp.eq.s32.totalorder %s19, 0
      %p112 = por %p110, %p111
      %p113 = scmp.ne.s32.totalorder %s102, %s105
      %p114 = scmp.eq.s32.totalorder %s24, 3
      %p115 = por %p113, %p114
      %p116 = scmp.ne.s32.totalorder %s105, %s106
      %p117 = scmp.eq.s32.totalorder %s24, 0
      %p118 = por %p116, %p117
      %p119 = scmp.ne.s32.totalorder %s105, %s106
      %p120 = scmp.eq.s32.totalorder %s25, 3
      %p121 = por %p119, %p120
      %p123 = scmp.ne.s32.totalorder %s106, %s122
      %p124 = scmp.eq.s32.totalorder %s25, 0
      %p125 = por %p123, %p124
      %s126 = ssub.s32 %s19, %s26
      %p127 = scmp.eq.s32.totalorder %s126, 0
      %s129 = sadd.s32 %s128, 1
      %s130 = scalar_select %p127, %s128, %s129
      %p133 = pneg %p127
      %p134 = scmp.eq.s32.totalorder %s19, 3
      %p135 = por %p133, %p134
      %p136 = scmp.ne.s32.totalorder %s128, %s131
      %p137 = scmp.eq.s32.totalorder %s19, 0
      %p138 = por %p136, %p137
      %p139 = scmp.ne.s32.totalorder %s128, %s131
      %p140 = scmp.eq.s32.totalorder %s24, 3
      %p141 = por %p139, %p140
      %p142 = scmp.ne.s32.totalorder %s131, %s132
      %p143 = scmp.eq.s32.totalorder %s24, 0
      %p144 = por %p142, %p143
      %p145 = scmp.ne.s32.totalorder %s131, %s132
      %p146 = scmp.eq.s32.totalorder %s25, 3
      %p147 = por %p145, %p146
      %p149 = scmp.ne.s32.totalorder %s132, %s148
      %p150 = scmp.eq.s32.totalorder %s25, 0
      %p151 = por %p149, %p150
      %p152 = scmp.le.s32.totalorder 1, %s19
      %p153 = scmp.lt.s32.totalorder %s19, 5
      %p154 = pnand %p152, %p153
      %p155 = pneg %p154
      // Predicated region
      $region9: #{tpu_custom_call.1} parent=5 // pred_check
        _
      $region10: #{tpu_custom_call.1} parent=5 // pred_check_branch
        %157 = sbr.rel (%p154) target = $region12
      $region11: #{tpu_custom_call.1} parent=5 // pred_region
        %s158 = ssub.s32 %s19, 1
        // Predicated region
        $region13: #{tpu_custom_call.1} parent=11 // pred_check
          %p159 = pneg %p40
        $region14: #{tpu_custom_call.1} parent=11 // pred_check_branch
          %161 = sbr.rel (%p159) target = $region16
        $region15: #{tpu_custom_call.1} parent=11 // pred_region
          _
        $region16: #{tpu_custom_call.1} parent=11 // pred_fallthru
          _
      $region12: #{tpu_custom_call.1} parent=5 // pred_fallthru
        _
      %p162 = scmp.lt.s32.totalorder %s19, 4
      // Predicated region
      $region17: #{tpu_custom_call.1} parent=5 // pred_check
        %p163 = pneg %p162
      $region18: #{tpu_custom_call.1} parent=5 // pred_check_branch
        %165 = sbr.rel (%p163) target = $region20
      $region19: #{tpu_custom_call.1} parent=5 // pred_region
        // Predicated region
        $region21: #{tpu_custom_call.1} parent=19 // pred_check
          %p166 = pneg %p60
        $region22: #{tpu_custom_call.1} parent=19 // pred_check_branch
          %168 = sbr.rel (%p166) target = $region24
        $region23: #{tpu_custom_call.1} parent=19 // pred_region
          %s169 = sand.u32 %s50, 1
          %s170 = scalar_lea.sflag [#allocation3], %s169
          %s171 = sand.u32 %s50, 1
          %s172 = smul.addr %s171, 72
          %s173 = scalar_lea.vmem [#allocation2], %s172
          %s175 = ssub.s32 1152, 1152
          %176 = vsyncadd %s170, %s175
          %s177 = smul.addr %s19, 64
          %s178 = scalar_lea.hbm %s1, %s177
          %s179 = sshll.u32 %s173, 4
          %s180 = int_to_ptr.vmem [resolvable:$true] %s179
          %185 = dma.hbm_to_vmem [thread:$0]  %s178, 1152, %s180, %s170, 256, 64, 4
        $region24: #{tpu_custom_call.1} parent=19 // pred_fallthru
          _
        // Predicated region
        $region25: #{tpu_custom_call.1} parent=19 // pred_check
          %p186 = pneg %p86
        $region26: #{tpu_custom_call.1} parent=19 // pred_check_branch
          %188 = sbr.rel (%p186) target = $region28
        $region27: #{tpu_custom_call.1} parent=19 // pred_region
          %s189 = sand.u32 %s19, 1
          %s190 = scalar_lea.sflag [#allocation6], %s189
          %s191 = sand.u32 %s76, 1
          %s192 = scalar_lea.vmem [#allocation5], %s191
          %s194 = ssub.s32 16, 16
          %195 = vsyncadd %s190, %s194
          %s196 = smul.addr %s19, 16
          %s197 = scalar_lea.hbm %s2, %s196
          %s199 = sshll.u32 %s192, 4
          %s200 = int_to_ptr.vmem [resolvable:$true] %s199
          %202 = dma.hbm_to_vmem [thread:$0]  %s197, 16, %s200, %s190
        $region28: #{tpu_custom_call.1} parent=19 // pred_fallthru
          _
        // Predicated region
        $region29: #{tpu_custom_call.1} parent=19 // pred_check
          %p203 = pneg %p112
        $region30: #{tpu_custom_call.1} parent=19 // pred_check_branch
          %205 = sbr.rel (%p203) target = $region32
        $region31: #{tpu_custom_call.1} parent=19 // pred_region
          %s206 = sand.u32 %s19, 1
          %s207 = scalar_lea.sflag [#allocation6], %s206
          %s208 = sand.u32 %s102, 1
          %s209 = scalar_lea.vmem [#allocation7], %s208
          %s211 = ssub.s32 16, 16
          %212 = vsyncadd %s207, %s211
          %s213 = smul.addr %s19, 16
          %s214 = scalar_lea.hbm %s3, %s213
          %s216 = sshll.u32 %s209, 4
          %s217 = int_to_ptr.vmem [resolvable:$true] %s216
          %219 = dma.hbm_to_vmem [thread:$0]  %s214, 16, %s217, %s207
        $region32: #{tpu_custom_call.1} parent=19 // pred_fallthru
          _
      $region20: #{tpu_custom_call.1} parent=5 // pred_fallthru
        _
      %p220 = scmp.le.s32.totalorder 1, %s19
      %p221 = scmp.lt.s32.totalorder %s19, 5
      %p222 = pnand %p220, %p221
      %p223 = pneg %p222
      // Predicated region
      $region33: #{tpu_custom_call.1} parent=5 // pred_check
        _
      $region34: #{tpu_custom_call.1} parent=5 // pred_check_branch
        %225 = sbr.rel (%p222) target = $region36
      $region35: #{tpu_custom_call.1} parent=5 // pred_region
        %s226 = ssub.s32 %s19, 1
        %s227 = sand.u32 %s53, 1
        %s228 = scalar_lea.sflag [#allocation3], %s227
        %s229 = sand.u32 %s53, 1
        %s230 = smul.addr %s229, 72
        %s231 = scalar_lea.vmem [#allocation2], %s230
        // Predicated region
        $region37: #{tpu_custom_call.1} parent=35 // pred_check
          %p232 = pneg %p66
        $region38: #{tpu_custom_call.1} parent=35 // pred_check_branch
          %234 = sbr.rel (%p232) target = $region40
        $region39: #{tpu_custom_call.1} parent=35 // pred_region
          %235 = dma.done %s228, 1152
        $region40: #{tpu_custom_call.1} parent=35 // pred_fallthru
          _
        %s236 = sand.u32 %s24, 1
        %s237 = scalar_lea.sflag [#allocation6], %s236
        %s238 = sand.u32 %s79, 1
        %s239 = scalar_lea.vmem [#allocation5], %s238
        // Predicated region
        $region41: #{tpu_custom_call.1} parent=35 // pred_check
          %p240 = pneg %p92
        $region42: #{tpu_custom_call.1} parent=35 // pred_check_branch
          %242 = sbr.rel (%p240) target = $region44
        $region43: #{tpu_custom_call.1} parent=35 // pred_region
          %243 = dma.done %s237, 16
        $region44: #{tpu_custom_call.1} parent=35 // pred_fallthru
          _
        %s244 = sand.u32 %s24, 1
        %s245 = scalar_lea.sflag [#allocation6], %s244
        %s246 = sand.u32 %s105, 1
        %s247 = scalar_lea.vmem [#allocation7], %s246
        // Predicated region
        $region45: #{tpu_custom_call.1} parent=35 // pred_check
          %p248 = pneg %p118
        $region46: #{tpu_custom_call.1} parent=35 // pred_check_branch
          %250 = sbr.rel (%p248) target = $region48
        $region47: #{tpu_custom_call.1} parent=35 // pred_region
          %251 = dma.done %s245, 16
        $region48: #{tpu_custom_call.1} parent=35 // pred_fallthru
          _
        %p252 = pneg %p40
        %p253 = pneg %p37
        %s254 = sand.u32 %s53, 1
        %s255 = scalar_lea.sflag [#allocation3], %s254
        %s256 = sand.u32 %s53, 1
        %s257 = smul.addr %s256, 72
        %s258 = scalar_lea.vmem [#allocation2], %s257
        %p259 = pneg %p66
        %p260 = pneg %p63
        %s261 = sand.u32 %s24, 1
        %s262 = scalar_lea.sflag [#allocation6], %s261
        %s263 = sand.u32 %s79, 1
        %s264 = scalar_lea.vmem [#allocation5], %s263
        %p265 = pneg %p92
        %p266 = pneg %p89
        %s267 = sand.u32 %s24, 1
        %s268 = scalar_lea.sflag [#allocation6], %s267
        %s269 = sand.u32 %s105, 1
        %s270 = scalar_lea.vmem [#allocation7], %s269
        %p271 = pneg %p118
        %p272 = pneg %p115
        %p273 = pneg %p144
        %p274 = pneg %p141
        %s275 = sand.u32 %s131, 1
        %s276 = scalar_lea.sflag [#allocation4], %s275
        %s277 = sand.u32 %s131, 1
        %s278 = smul.addr %s277, 584
        %s279 = scalar_lea.vmem [#allocation8], %s278
        %v281 = vld [vmem:[%s0] sm:$0xff]
        %v282 = vld [vmem:[%s0 + $0x8] sm:$0xff]
        %v283 = vld [vmem:[%s0 + $0x10] sm:$0xff]
        %v284 = vld [vmem:[%s0 + $0x18] sm:$0xff]
        %v285 = vld [vmem:[%s0 + $0x20] sm:$0xff]
        %v286 = vld [vmem:[%s0 + $0x28] sm:$0xff]
        %v287 = vld [vmem:[%s0 + $0x30] sm:$0xff]
        %v288 = vld [vmem:[%s0 + $0x38] sm:$0xff]
        %v289 = vld [vmem:[%s0 + $0x40] sm:$0xff]
        %v290 = vld [vmem:[%s0 + $0x48] sm:$0xff]
        %v291 = vld [vmem:[%s0 + $0x50] sm:$0xff]
        %v292 = vld [vmem:[%s0 + $0x58] sm:$0xff]
        %v293 = vld [vmem:[%s0 + $0x60] sm:$0xff]
        %v294 = vld [vmem:[%s0 + $0x68] sm:$0xff]
        %v295 = vld [vmem:[%s0 + $0x70] sm:$0xff]
        %v296 = vld [vmem:[%s0 + $0x78] sm:$0xff]
        %v297 = vld [vmem:[%s0 + $0x80] sm:$0xff]
        %v298 = vld [vmem:[%s0 + $0x88] sm:$0xff]
        %v299 = vld [vmem:[%s0 + $0x90] sm:$0xff]
        %v300 = vld [vmem:[%s0 + $0x98] sm:$0xff]
        %v301 = vld [vmem:[%s0 + $0xa0] sm:$0xff]
        %v302 = vld [vmem:[%s0 + $0xa8] sm:$0xff]
        %v303 = vld [vmem:[%s0 + $0xb0] sm:$0xff]
        %v304 = vld [vmem:[%s0 + $0xb8] sm:$0xff]
        %v305 = vld [vmem:[%s0 + $0xc0] sm:$0xff]
        %v306 = vld [vmem:[%s0 + $0xc8] sm:$0xff]
        %v307 = vld [vmem:[%s0 + $0xd0] sm:$0xff]
        %v308 = vld [vmem:[%s0 + $0xd8] sm:$0xff]
        %v309 = vld [vmem:[%s0 + $0xe0] sm:$0xff]
        %v310 = vld [vmem:[%s0 + $0xe8] sm:$0xff]
        %v311 = vld [vmem:[%s0 + $0xf0] sm:$0xff]
        %v312 = vld [vmem:[%s0 + $0xf8] sm:$0xff]
        %v313 = vld [vmem:[%s0 + $0x100] sm:$0xff]
        %v314 = vld [vmem:[%s0 + $0x108] sm:$0xff]
        %v315 = vld [vmem:[%s0 + $0x110] sm:$0xff]
        %v316 = vld [vmem:[%s0 + $0x118] sm:$0xff]
        %v317 = vld [vmem:[%s0 + $0x120] sm:$0xff]
        %v318 = vld [vmem:[%s0 + $0x128] sm:$0xff]
        %v319 = vld [vmem:[%s0 + $0x130] sm:$0xff]
        %v320 = vld [vmem:[%s0 + $0x138] sm:$0xff]
        %v321 = vld [vmem:[%s0 + $0x140] sm:$0xff]
        %v322 = vld [vmem:[%s0 + $0x148] sm:$0xff]
        %v323 = vld [vmem:[%s0 + $0x150] sm:$0xff]
        %v324 = vld [vmem:[%s0 + $0x158] sm:$0xff]
        %v325 = vld [vmem:[%s0 + $0x160] sm:$0xff]
        %v326 = vld [vmem:[%s0 + $0x168] sm:$0xff]
        %v327 = vld [vmem:[%s0 + $0x170] sm:$0xff]
        %v328 = vld [vmem:[%s0 + $0x178] sm:$0xff]
        %v329 = vld [vmem:[%s0 + $0x180] sm:$0xff]
        %v330 = vld [vmem:[%s0 + $0x188] sm:$0xff]
        %v331 = vld [vmem:[%s0 + $0x190] sm:$0xff]
        %v332 = vld [vmem:[%s0 + $0x198] sm:$0xff]
        %v333 = vld [vmem:[%s0 + $0x1a0] sm:$0xff]
        %v334 = vld [vmem:[%s0 + $0x1a8] sm:$0xff]
        %v335 = vld [vmem:[%s0 + $0x1b0] sm:$0xff]
        %v336 = vld [vmem:[%s0 + $0x1b8] sm:$0xff]
        %v337 = vld [vmem:[%s0 + $0x1c0] sm:$0xff]
        %v338 = vld [vmem:[%s0 + $0x1c8] sm:$0xff]
        %v339 = vld [vmem:[%s0 + $0x1d0] sm:$0xff]
        %v340 = vld [vmem:[%s0 + $0x1d8] sm:$0xff]
        %v341 = vld [vmem:[%s0 + $0x1e0] sm:$0xff]
        %v342 = vld [vmem:[%s0 + $0x1e8] sm:$0xff]
        %v343 = vld [vmem:[%s0 + $0x1f0] sm:$0xff]
        %v344 = vld [vmem:[%s0 + $0x1f8] sm:$0xff]
        %v345 = vld [vmem:[%s0 + $0x200] sm:$0xff]
        %v346 = vld [vmem:[%s0 + $0x208] sm:$0xff]
        %v347 = vld [vmem:[%s0 + $0x210] sm:$0xff]
        %v348 = vld [vmem:[%s0 + $0x218] sm:$0xff]
        %v349 = vld [vmem:[%s0 + $0x220] sm:$0xff]
        %v350 = vld [vmem:[%s0 + $0x228] sm:$0xff]
        %v351 = vld [vmem:[%s0 + $0x230] sm:$0xff]
        %v352 = vld [vmem:[%s0 + $0x238] sm:$0xff]
        %v353 = vld [vmem:[%s0 + $0x240] sm:$0xff]
        %v354 = vld [vmem:[%s231] sm:$0xf]
        %v355 = vld [vmem:[%s231 + $0x4] sm:$0xf]
        %v356 = vld [vmem:[%s231 + $0x8] sm:$0xf]
        %v357 = vld [vmem:[%s231 + $0xc] sm:$0xf]
        %v358 = vld [vmem:[%s231 + $0x10] sm:$0xf]
        %v359 = vld [vmem:[%s231 + $0x14] sm:$0xf]
        %v360 = vld [vmem:[%s231 + $0x18] sm:$0xf]
        %v361 = vld [vmem:[%s231 + $0x1c] sm:$0xf]
        %v362 = vld [vmem:[%s231 + $0x20] sm:$0xf]
        %v363 = vld [vmem:[%s231 + $0x24] sm:$0xf]
        %v364 = vld [vmem:[%s231 + $0x28] sm:$0xf]
        %v365 = vld [vmem:[%s231 + $0x2c] sm:$0xf]
        %v366 = vld [vmem:[%s231 + $0x30] sm:$0xf]
        %v367 = vld [vmem:[%s231 + $0x34] sm:$0xf]
        %v368 = vld [vmem:[%s231 + $0x38] sm:$0xf]
        %v369 = vld [vmem:[%s231 + $0x3c] sm:$0xf]
        %v370 = vld [vmem:[%s231 + $0x40] sm:$0xf]
        %v371 = vld [vmem:[%s231 + $0x44] sm:$0xf]
        %v445 = vunpack.c.l.b16 %v281
        %v446 = vunpack.c.h.b16 %v281
        %v447 = vunpack.c.l.b16 %v282
        %v448 = vunpack.c.h.b16 %v282
        %v449 = vunpack.c.l.b16 %v283
        %v450 = vunpack.c.h.b16 %v283
        %v451 = vunpack.c.l.b16 %v284
        %v452 = vunpack.c.h.b16 %v284
        %v453 = vunpack.c.l.b16 %v285
        %v454 = vunpack.c.h.b16 %v285
        %v455 = vunpack.c.l.b16 %v286
        %v456 = vunpack.c.h.b16 %v286
        %v457 = vunpack.c.l.b16 %v287
        %v458 = vunpack.c.h.b16 %v287
        %v459 = vunpack.c.l.b16 %v288
        %v460 = vunpack.c.h.b16 %v288
        %v461 = vunpack.c.l.b16 %v289
        %v462 = vunpack.c.h.b16 %v289
        %v463 = vunpack.c.l.b16 %v290
        %v464 = vunpack.c.h.b16 %v290
        %v465 = vunpack.c.l.b16 %v291
        %v466 = vunpack.c.h.b16 %v291
        %v467 = vunpack.c.l.b16 %v292
        %v468 = vunpack.c.h.b16 %v292
        %v469 = vunpack.c.l.b16 %v293
        %v470 = vunpack.c.h.b16 %v293
        %v471 = vunpack.c.l.b16 %v294
        %v472 = vunpack.c.h.b16 %v294
        %v473 = vunpack.c.l.b16 %v295
        %v474 = vunpack.c.h.b16 %v295
        %v475 = vunpack.c.l.b16 %v296
        %v476 = vunpack.c.h.b16 %v296
        %v477 = vunpack.c.l.b16 %v297
        %v478 = vunpack.c.h.b16 %v297
        %v479 = vunpack.c.l.b16 %v298
        %v480 = vunpack.c.h.b16 %v298
        %v481 = vunpack.c.l.b16 %v299
        %v482 = vunpack.c.h.b16 %v299
        %v483 = vunpack.c.l.b16 %v300
        %v484 = vunpack.c.h.b16 %v300
        %v485 = vunpack.c.l.b16 %v301
        %v486 = vunpack.c.h.b16 %v301
        %v487 = vunpack.c.l.b16 %v302
        %v488 = vunpack.c.h.b16 %v302
        %v489 = vunpack.c.l.b16 %v303
        %v490 = vunpack.c.h.b16 %v303
        %v491 = vunpack.c.l.b16 %v304
        %v492 = vunpack.c.h.b16 %v304
        %v493 = vunpack.c.l.b16 %v305
        %v494 = vunpack.c.h.b16 %v305
        %v495 = vunpack.c.l.b16 %v306
        %v496 = vunpack.c.h.b16 %v306
        %v497 = vunpack.c.l.b16 %v307
        %v498 = vunpack.c.h.b16 %v307
        %v499 = vunpack.c.l.b16 %v308
        %v500 = vunpack.c.h.b16 %v308
        %v501 = vunpack.c.l.b16 %v309
        %v502 = vunpack.c.h.b16 %v309
        %v503 = vunpack.c.l.b16 %v310
        %v504 = vunpack.c.h.b16 %v310
        %v505 = vunpack.c.l.b16 %v311
        %v506 = vunpack.c.h.b16 %v311
        %v507 = vunpack.c.l.b16 %v312
        %v508 = vunpack.c.h.b16 %v312
        %v509 = vunpack.c.l.b16 %v313
        %v510 = vunpack.c.h.b16 %v313
        %v511 = vunpack.c.l.b16 %v314
        %v512 = vunpack.c.h.b16 %v314
        %v513 = vunpack.c.l.b16 %v315
        %v514 = vunpack.c.h.b16 %v315
        %v515 = vunpack.c.l.b16 %v316
        %v516 = vunpack.c.h.b16 %v316
        %v517 = vunpack.c.l.b16 %v317
        %v518 = vunpack.c.h.b16 %v317
        %v519 = vunpack.c.l.b16 %v318
        %v520 = vunpack.c.h.b16 %v318
        %v521 = vunpack.c.l.b16 %v319
        %v522 = vunpack.c.h.b16 %v319
        %v523 = vunpack.c.l.b16 %v320
        %v524 = vunpack.c.h.b16 %v320
        %v525 = vunpack.c.l.b16 %v321
        %v526 = vunpack.c.h.b16 %v321
        %v527 = vunpack.c.l.b16 %v322
        %v528 = vunpack.c.h.b16 %v322
        %v529 = vunpack.c.l.b16 %v323
        %v530 = vunpack.c.h.b16 %v323
        %v531 = vunpack.c.l.b16 %v324
        %v532 = vunpack.c.h.b16 %v324
        %v533 = vunpack.c.l.b16 %v325
        %v534 = vunpack.c.h.b16 %v325
        %v535 = vunpack.c.l.b16 %v326
        %v536 = vunpack.c.h.b16 %v326
        %v537 = vunpack.c.l.b16 %v327
        %v538 = vunpack.c.h.b16 %v327
        %v539 = vunpack.c.l.b16 %v328
        %v540 = vunpack.c.h.b16 %v328
        %v541 = vunpack.c.l.b16 %v329
        %v542 = vunpack.c.h.b16 %v329
        %v543 = vunpack.c.l.b16 %v330
        %v544 = vunpack.c.h.b16 %v330
        %v545 = vunpack.c.l.b16 %v331
        %v546 = vunpack.c.h.b16 %v331
        %v547 = vunpack.c.l.b16 %v332
        %v548 = vunpack.c.h.b16 %v332
        %v549 = vunpack.c.l.b16 %v333
        %v550 = vunpack.c.h.b16 %v333
        %v551 = vunpack.c.l.b16 %v334
        %v552 = vunpack.c.h.b16 %v334
        %v553 = vunpack.c.l.b16 %v335
        %v554 = vunpack.c.h.b16 %v335
        %v555 = vunpack.c.l.b16 %v336
        %v556 = vunpack.c.h.b16 %v336
        %v557 = vunpack.c.l.b16 %v337
        %v558 = vunpack.c.h.b16 %v337
        %v559 = vunpack.c.l.b16 %v338
        %v560 = vunpack.c.h.b16 %v338
        %v561 = vunpack.c.l.b16 %v339
        %v562 = vunpack.c.h.b16 %v339
        %v563 = vunpack.c.l.b16 %v340
        %v564 = vunpack.c.h.b16 %v340
        %v565 = vunpack.c.l.b16 %v341
        %v566 = vunpack.c.h.b16 %v341
        %v567 = vunpack.c.l.b16 %v342
        %v568 = vunpack.c.h.b16 %v342
        %v569 = vunpack.c.l.b16 %v343
        %v570 = vunpack.c.h.b16 %v343
        %v571 = vunpack.c.l.b16 %v344
        %v572 = vunpack.c.h.b16 %v344
        %v573 = vunpack.c.l.b16 %v345
        %v574 = vunpack.c.h.b16 %v345
        %v575 = vunpack.c.l.b16 %v346
        %v576 = vunpack.c.h.b16 %v346
        %v577 = vunpack.c.l.b16 %v347
        %v578 = vunpack.c.h.b16 %v347
        %v579 = vunpack.c.l.b16 %v348
        %v580 = vunpack.c.h.b16 %v348
        %v581 = vunpack.c.l.b16 %v349
        %v582 = vunpack.c.h.b16 %v349
        %v583 = vunpack.c.l.b16 %v350
        %v584 = vunpack.c.h.b16 %v350
        %v585 = vunpack.c.l.b16 %v351
        %v586 = vunpack.c.h.b16 %v351
        %v587 = vunpack.c.l.b16 %v352
        %v588 = vunpack.c.h.b16 %v352
        %v589 = vunpack.c.l.b16 %v353
        %v590 = vunpack.c.h.b16 %v353
        %v591 = vpack.c.b16 %v447, %v445
        %v592 = vpack.c.b16 %v448, %v446
        %v593 = vpack.c.b16 %v451, %v449
        %v594 = vpack.c.b16 %v452, %v450
        %v595 = vpack.c.b16 %v455, %v453
        %v596 = vpack.c.b16 %v456, %v454
        %v597 = vpack.c.b16 %v459, %v457
        %v598 = vpack.c.b16 %v460, %v458
        %v599 = vpack.c.b16 %v463, %v461
        %v600 = vpack.c.b16 %v464, %v462
        %v601 = vpack.c.b16 %v467, %v465
        %v602 = vpack.c.b16 %v468, %v466
        %v603 = vpack.c.b16 %v471, %v469
        %v604 = vpack.c.b16 %v472, %v470
        %v605 = vpack.c.b16 %v475, %v473
        %v606 = vpack.c.b16 %v476, %v474
        %v607 = vpack.c.b16 %v479, %v477
        %v608 = vpack.c.b16 %v480, %v478
        %v609 = vpack.c.b16 %v483, %v481
        %v610 = vpack.c.b16 %v484, %v482
        %v611 = vpack.c.b16 %v487, %v485
        %v612 = vpack.c.b16 %v488, %v486
        %v613 = vpack.c.b16 %v491, %v489
        %v614 = vpack.c.b16 %v492, %v490
        %v615 = vpack.c.b16 %v495, %v493
        %v616 = vpack.c.b16 %v496, %v494
        %v617 = vpack.c.b16 %v499, %v497
        %v618 = vpack.c.b16 %v500, %v498
        %v619 = vpack.c.b16 %v503, %v501
        %v620 = vpack.c.b16 %v504, %v502
        %v621 = vpack.c.b16 %v507, %v505
        %v622 = vpack.c.b16 %v508, %v506
        %v623 = vpack.c.b16 %v511, %v509
        %v624 = vpack.c.b16 %v512, %v510
        %v625 = vpack.c.b16 %v515, %v513
        %v626 = vpack.c.b16 %v516, %v514
        %v627 = vpack.c.b16 %v519, %v517
        %v628 = vpack.c.b16 %v520, %v518
        %v629 = vpack.c.b16 %v523, %v521
        %v630 = vpack.c.b16 %v524, %v522
        %v631 = vpack.c.b16 %v527, %v525
        %v632 = vpack.c.b16 %v528, %v526
        %v633 = vpack.c.b16 %v531, %v529
        %v634 = vpack.c.b16 %v532, %v530
        %v635 = vpack.c.b16 %v535, %v533
        %v636 = vpack.c.b16 %v536, %v534
        %v637 = vpack.c.b16 %v539, %v537
        %v638 = vpack.c.b16 %v540, %v538
        %v639 = vpack.c.b16 %v543, %v541
        %v640 = vpack.c.b16 %v544, %v542
        %v641 = vpack.c.b16 %v547, %v545
        %v642 = vpack.c.b16 %v548, %v546
        %v643 = vpack.c.b16 %v551, %v549
        %v644 = vpack.c.b16 %v552, %v550
        %v645 = vpack.c.b16 %v555, %v553
        %v646 = vpack.c.b16 %v556, %v554
        %v647 = vpack.c.b16 %v559, %v557
        %v648 = vpack.c.b16 %v560, %v558
        %v649 = vpack.c.b16 %v563, %v561
        %v650 = vpack.c.b16 %v564, %v562
        %v651 = vpack.c.b16 %v567, %v565
        %v652 = vpack.c.b16 %v568, %v566
        %v653 = vpack.c.b16 %v571, %v569
        %v654 = vpack.c.b16 %v572, %v570
        %v655 = vpack.c.b16 %v575, %v573
        %v656 = vpack.c.b16 %v576, %v574
        %v657 = vpack.c.b16 %v579, %v577
        %v658 = vpack.c.b16 %v580, %v578
        %v659 = vpack.c.b16 %v583, %v581
        %v660 = vpack.c.b16 %v584, %v582
        %v661 = vpack.c.b16 %v587, %v585
        %v662 = vpack.c.b16 %v588, %v586
        %v663 = vpack.c.b16 %v589, %v589
        %v664 = vpack.c.b16 %v590, %v590
        %v720 = vunpack.c.l.b16 %v354
        %v721 = vunpack.c.l.b16 %v355
        %v722 = vunpack.c.l.b16 %v356
        %v723 = vunpack.c.l.b16 %v357
        %v724 = vunpack.c.l.b16 %v358
        %v725 = vunpack.c.l.b16 %v359
        %v726 = vunpack.c.l.b16 %v360
        %v727 = vunpack.c.l.b16 %v361
        %v728 = vunpack.c.l.b16 %v362
        %v729 = vunpack.c.l.b16 %v363
        %v730 = vunpack.c.l.b16 %v364
        %v731 = vunpack.c.l.b16 %v365
        %v732 = vunpack.c.l.b16 %v366
        %v733 = vunpack.c.l.b16 %v367
        %v734 = vunpack.c.l.b16 %v368
        %v735 = vunpack.c.l.b16 %v369
        %v736 = vunpack.c.l.b16 %v370
        %v737 = vunpack.c.l.b16 %v371
        %v738 = vpack.c.b16 %v721, %v720
        %v739 = vpack.c.b16 %v723, %v722
        %v740 = vpack.c.b16 %v725, %v724
        %v741 = vpack.c.b16 %v727, %v726
        %v742 = vpack.c.b16 %v729, %v728
        %v743 = vpack.c.b16 %v731, %v730
        %v744 = vpack.c.b16 %v733, %v732
        %v745 = vpack.c.b16 %v735, %v734
        %v746 = vpack.c.b16 %v737, %v736
        %vm756 = vcmask 130048
        %v758 = vsel %vm756, %v592, 0
        %v761 = vsel %vm756, %v594, 0
        %v764 = vsel %vm756, %v596, 0
        %v767 = vsel %vm756, %v598, 0
        %v770 = vsel %vm756, %v600, 0
        %v773 = vsel %vm756, %v602, 0
        %v776 = vsel %vm756, %v604, 0
        %v779 = vsel %vm756, %v606, 0
        %v782 = vsel %vm756, %v608, 0
        %v785 = vsel %vm756, %v610, 0
        %v788 = vsel %vm756, %v612, 0
        %v791 = vsel %vm756, %v614, 0
        %v794 = vsel %vm756, %v616, 0
        %v797 = vsel %vm756, %v618, 0
        %v800 = vsel %vm756, %v620, 0
        %v803 = vsel %vm756, %v622, 0
        %v806 = vsel %vm756, %v624, 0
        %v809 = vsel %vm756, %v626, 0
        %v812 = vsel %vm756, %v628, 0
        %v815 = vsel %vm756, %v630, 0
        %v818 = vsel %vm756, %v632, 0
        %v821 = vsel %vm756, %v634, 0
        %v824 = vsel %vm756, %v636, 0
        %v827 = vsel %vm756, %v638, 0
        %v830 = vsel %vm756, %v640, 0
        %v833 = vsel %vm756, %v642, 0
        %v836 = vsel %vm756, %v644, 0
        %v839 = vsel %vm756, %v646, 0
        %v842 = vsel %vm756, %v648, 0
        %v845 = vsel %vm756, %v650, 0
        %v848 = vsel %vm756, %v652, 0
        %v851 = vsel %vm756, %v654, 0
        %v854 = vsel %vm756, %v656, 0
        %v857 = vsel %vm756, %v658, 0
        %v860 = vsel %vm756, %v660, 0
        %v863 = vsel %vm756, %v662, 0
        %v866 = vsel %vm756, %v664, 0
        %868 = vmatprep.subr.bf16.mxu0 0
        %869 = vmatpush1.bf16.msra.mxu0 %v745
        %870 = vmatprep.subr.bf16.mxu0 0
        %871 = vmatpush1.bf16.msra.mxu0 %v744
        %872 = vmatprep.subr.bf16.mxu0 0
        %873 = vmatpush1.bf16.msra.mxu0 %v743
        %874 = vmatprep.subr.bf16.mxu0 0
        %875 = vmatpush1.bf16.msra.mxu0 %v742
        %876 = vmatprep.subr.bf16.mxu0 0
        %877 = vmatpush1.bf16.msra.mxu0 %v741
        %878 = vmatprep.subr.bf16.mxu0 0
        %879 = vmatpush1.bf16.msra.mxu0 %v740
        %880 = vmatprep.subr.bf16.mxu0 0
        %881 = vmatpush1.bf16.msra.mxu0 %v739
        %882 = vmatprep.subr.bf16.mxu0 0
        %883 = vmatpush1.bf16.msra.mxu0 %v738
        %884 = vmatprep.subr.bf16.mxu0 0
        %885 = vmatpush2.bf16.msra.mxu0 0
        %886 = vmatprep.subr.bf16.mxu0 0
        %887 = vmatpush2.bf16.msra.mxu0 0
        %888 = vmatprep.subr.bf16.mxu0 0
        %889 = vmatpush2.bf16.msra.mxu0 0
        %890 = vmatprep.subr.bf16.mxu0 0
        %891 = vmatpush2.bf16.msra.mxu0 0
        %892 = vmatprep.subr.bf16.mxu0 0
        %893 = vmatpush2.bf16.msra.mxu0 0
        %894 = vmatprep.subr.bf16.mxu0 0
        %895 = vmatpush2.bf16.msra.mxu0 0
        %896 = vmatprep.subr.bf16.mxu0 0
        %897 = vmatpush2.bf16.msra.mxu0 0
        %898 = vmatprep.subr.bf16.mxu0 0
        %899 = vmatpush2.bf16.msra.mxu0 %v746
        %900 = vmatprep.mubr.bf16.mxu0 %v758
        %901 = vmatmul.mubr.bf16.gmra.mxu0 %v591
        %v902 = vpop.f32.mrf.mxu0
        %v903 = vadd.f32 0.0, %v902
        %v904 = vpop.f32.mrf.mxu0
        %v905 = vpop.f32.mrf.mxu0
        %v906 = vadd.f32 0.0, %v905
        %v907 = vpop.f32.mrf.mxu0
        %908 = vmatprep.mubr.bf16.mxu0 %v761
        %909 = vmatmul.mubr.bf16.gmra.mxu0 %v593
        %v910 = vpop.f32.mrf.mxu0
        %v911 = vadd.f32 0.0, %v910
        %v912 = vpop.f32.mrf.mxu0
        %v913 = vpop.f32.mrf.mxu0
        %v914 = vadd.f32 0.0, %v913
        %v915 = vpop.f32.mrf.mxu0
        %916 = vmatprep.mubr.bf16.mxu0 %v764
        %917 = vmatmul.mubr.bf16.gmra.mxu0 %v595
        %v918 = vpop.f32.mrf.mxu0
        %v919 = vadd.f32 0.0, %v918
        %v920 = vpop.f32.mrf.mxu0
        %v921 = vpop.f32.mrf.mxu0
        %v922 = vadd.f32 0.0, %v921
        %v923 = vpop.f32.mrf.mxu0
        %924 = vmatprep.mubr.bf16.mxu0 %v767
        %925 = vmatmul.mubr.bf16.gmra.mxu0 %v597
        %v926 = vpop.f32.mrf.mxu0
        %v927 = vadd.f32 0.0, %v926
        %v928 = vpop.f32.mrf.mxu0
        %v929 = vpop.f32.mrf.mxu0
        %v930 = vadd.f32 0.0, %v929
        %v931 = vpop.f32.mrf.mxu0
        %932 = vmatprep.mubr.bf16.mxu0 %v770
        %933 = vmatmul.mubr.bf16.gmra.mxu0 %v599
        %v934 = vpop.f32.mrf.mxu0
        %v935 = vadd.f32 0.0, %v934
        %v936 = vpop.f32.mrf.mxu0
        %v937 = vpop.f32.mrf.mxu0
        %v938 = vadd.f32 0.0, %v937
        %v939 = vpop.f32.mrf.mxu0
        %940 = vmatprep.mubr.bf16.mxu0 %v773
        %941 = vmatmul.mubr.bf16.gmra.mxu0 %v601
        %v942 = vpop.f32.mrf.mxu0
        %v943 = vadd.f32 0.0, %v942
        %v944 = vpop.f32.mrf.mxu0
        %v945 = vpop.f32.mrf.mxu0
        %v946 = vadd.f32 0.0, %v945
        %v947 = vpop.f32.mrf.mxu0
        %948 = vmatprep.mubr.bf16.mxu0 %v776
        %949 = vmatmul.mubr.bf16.gmra.mxu0 %v603
        %v950 = vpop.f32.mrf.mxu0
        %v951 = vadd.f32 0.0, %v950
        %v952 = vpop.f32.mrf.mxu0
        %v953 = vpop.f32.mrf.mxu0
        %v954 = vadd.f32 0.0, %v953
        %v955 = vpop.f32.mrf.mxu0
        %956 = vmatprep.mubr.bf16.mxu0 %v779
        %957 = vmatmul.mubr.bf16.gmra.mxu0 %v605
        %v958 = vpop.f32.mrf.mxu0
        %v959 = vadd.f32 0.0, %v958
        %v960 = vpop.f32.mrf.mxu0
        %v961 = vpop.f32.mrf.mxu0
        %v962 = vadd.f32 0.0, %v961
        %v963 = vpop.f32.mrf.mxu0
        %964 = vmatprep.mubr.bf16.mxu0 %v782
        %965 = vmatmul.mubr.bf16.gmra.mxu0 %v607
        %v966 = vpop.f32.mrf.mxu0
        %v967 = vadd.f32 0.0, %v966
        %v968 = vpop.f32.mrf.mxu0
        %v969 = vpop.f32.mrf.mxu0
        %v970 = vadd.f32 0.0, %v969
        %v971 = vpop.f32.mrf.mxu0
        %972 = vmatprep.mubr.bf16.mxu0 %v785
        %973 = vmatmul.mubr.bf16.gmra.mxu0 %v609
        %v974 = vpop.f32.mrf.mxu0
        %v975 = vadd.f32 0.0, %v974
        %v976 = vpop.f32.mrf.mxu0
        %v977 = vpop.f32.mrf.mxu0
        %v978 = vadd.f32 0.0, %v977
        %v979 = vpop.f32.mrf.mxu0
        %980 = vmatprep.mubr.bf16.mxu0 %v788
        %981 = vmatmul.mubr.bf16.gmra.mxu0 %v611
        %v982 = vpop.f32.mrf.mxu0
        %v983 = vadd.f32 0.0, %v982
        %v984 = vpop.f32.mrf.mxu0
        %v985 = vpop.f32.mrf.mxu0
        %v986 = vadd.f32 0.0, %v985
        %v987 = vpop.f32.mrf.mxu0
        %988 = vmatprep.mubr.bf16.mxu0 %v791
        %989 = vmatmul.mubr.bf16.gmra.mxu0 %v613
        %v990 = vpop.f32.mrf.mxu0
        %v991 = vadd.f32 0.0, %v990
        %v992 = vpop.f32.mrf.mxu0
        %v993 = vpop.f32.mrf.mxu0
        %v994 = vadd.f32 0.0, %v993
        %v995 = vpop.f32.mrf.mxu0
        %996 = vmatprep.mubr.bf16.mxu0 %v794
        %997 = vmatmul.mubr.bf16.gmra.mxu0 %v615
        %v998 = vpop.f32.mrf.mxu0
        %v999 = vadd.f32 0.0, %v998
        %v1000 = vpop.f32.mrf.mxu0
        %v1001 = vpop.f32.mrf.mxu0
        %v1002 = vadd.f32 0.0, %v1001
        %v1003 = vpop.f32.mrf.mxu0
        %1004 = vmatprep.mubr.bf16.mxu0 %v797
        %1005 = vmatmul.mubr.bf16.gmra.mxu0 %v617
        %v1006 = vpop.f32.mrf.mxu0
        %v1007 = vadd.f32 0.0, %v1006
        %v1008 = vpop.f32.mrf.mxu0
        %v1009 = vpop.f32.mrf.mxu0
        %v1010 = vadd.f32 0.0, %v1009
        %v1011 = vpop.f32.mrf.mxu0
        %1012 = vmatprep.mubr.bf16.mxu0 %v800
        %1013 = vmatmul.mubr.bf16.gmra.mxu0 %v619
        %v1014 = vpop.f32.mrf.mxu0
        %v1015 = vadd.f32 0.0, %v1014
        %v1016 = vpop.f32.mrf.mxu0
        %v1017 = vpop.f32.mrf.mxu0
        %v1018 = vadd.f32 0.0, %v1017
        %v1019 = vpop.f32.mrf.mxu0
        %1020 = vmatprep.mubr.bf16.mxu0 %v803
        %1021 = vmatmul.mubr.bf16.gmra.mxu0 %v621
        %v1022 = vpop.f32.mrf.mxu0
        %v1023 = vadd.f32 0.0, %v1022
        %v1024 = vpop.f32.mrf.mxu0
        %v1025 = vpop.f32.mrf.mxu0
        %v1026 = vadd.f32 0.0, %v1025
        %v1027 = vpop.f32.mrf.mxu0
        %1028 = vmatprep.mubr.bf16.mxu0 %v806
        %1029 = vmatmul.mubr.bf16.gmra.mxu0 %v623
        %v1030 = vpop.f32.mrf.mxu0
        %v1031 = vadd.f32 0.0, %v1030
        %v1032 = vpop.f32.mrf.mxu0
        %v1033 = vpop.f32.mrf.mxu0
        %v1034 = vadd.f32 0.0, %v1033
        %v1035 = vpop.f32.mrf.mxu0
        %1036 = vmatprep.mubr.bf16.mxu0 %v809
        %1037 = vmatmul.mubr.bf16.gmra.mxu0 %v625
        %v1038 = vpop.f32.mrf.mxu0
        %v1039 = vadd.f32 0.0, %v1038
        %v1040 = vpop.f32.mrf.mxu0
        %v1041 = vpop.f32.mrf.mxu0
        %v1042 = vadd.f32 0.0, %v1041
        %v1043 = vpop.f32.mrf.mxu0
        %1044 = vmatprep.mubr.bf16.mxu0 %v812
        %1045 = vmatmul.mubr.bf16.gmra.mxu0 %v627
        %v1046 = vpop.f32.mrf.mxu0
        %v1047 = vadd.f32 0.0, %v1046
        %v1048 = vpop.f32.mrf.mxu0
        %v1049 = vpop.f32.mrf.mxu0
        %v1050 = vadd.f32 0.0, %v1049
        %v1051 = vpop.f32.mrf.mxu0
        %1052 = vmatprep.mubr.bf16.mxu0 %v815
        %1053 = vmatmul.mubr.bf16.gmra.mxu0 %v629
        %v1054 = vpop.f32.mrf.mxu0
        %v1055 = vadd.f32 0.0, %v1054
        %v1056 = vpop.f32.mrf.mxu0
        %v1057 = vpop.f32.mrf.mxu0
        %v1058 = vadd.f32 0.0, %v1057
        %v1059 = vpop.f32.mrf.mxu0
        %1060 = vmatprep.mubr.bf16.mxu0 %v818
        %1061 = vmatmul.mubr.bf16.gmra.mxu0 %v631
        %v1062 = vpop.f32.mrf.mxu0
        %v1063 = vadd.f32 0.0, %v1062
        %v1064 = vpop.f32.mrf.mxu0
        %v1065 = vpop.f32.mrf.mxu0
        %v1066 = vadd.f32 0.0, %v1065
        %v1067 = vpop.f32.mrf.mxu0
        %1068 = vmatprep.mubr.bf16.mxu0 %v821
        %1069 = vmatmul.mubr.bf16.gmra.mxu0 %v633
        %v1070 = vpop.f32.mrf.mxu0
        %v1071 = vadd.f32 0.0, %v1070
        %v1072 = vpop.f32.mrf.mxu0
        %v1073 = vpop.f32.mrf.mxu0
        %v1074 = vadd.f32 0.0, %v1073
        %v1075 = vpop.f32.mrf.mxu0
        %1076 = vmatprep.mubr.bf16.mxu0 %v824
        %1077 = vmatmul.mubr.bf16.gmra.mxu0 %v635
        %v1078 = vpop.f32.mrf.mxu0
        %v1079 = vadd.f32 0.0, %v1078
        %v1080 = vpop.f32.mrf.mxu0
        %v1081 = vpop.f32.mrf.mxu0
        %v1082 = vadd.f32 0.0, %v1081
        %v1083 = vpop.f32.mrf.mxu0
        %1084 = vmatprep.mubr.bf16.mxu0 %v827
        %1085 = vmatmul.mubr.bf16.gmra.mxu0 %v637
        %v1086 = vpop.f32.mrf.mxu0
        %v1087 = vadd.f32 0.0, %v1086
        %v1088 = vpop.f32.mrf.mxu0
        %v1089 = vpop.f32.mrf.mxu0
        %v1090 = vadd.f32 0.0, %v1089
        %v1091 = vpop.f32.mrf.mxu0
        %1092 = vmatprep.mubr.bf16.mxu0 %v830
        %1093 = vmatmul.mubr.bf16.gmra.mxu0 %v639
        %v1094 = vpop.f32.mrf.mxu0
        %v1095 = vadd.f32 0.0, %v1094
        %v1096 = vpop.f32.mrf.mxu0
        %v1097 = vpop.f32.mrf.mxu0
        %v1098 = vadd.f32 0.0, %v1097
        %v1099 = vpop.f32.mrf.mxu0
        %1100 = vmatprep.mubr.bf16.mxu0 %v833
        %1101 = vmatmul.mubr.bf16.gmra.mxu0 %v641
        %v1102 = vpop.f32.mrf.mxu0
        %v1103 = vadd.f32 0.0, %v1102
        %v1104 = vpop.f32.mrf.mxu0
        %v1105 = vpop.f32.mrf.mxu0
        %v1106 = vadd.f32 0.0, %v1105
        %v1107 = vpop.f32.mrf.mxu0
        %1108 = vmatprep.mubr.bf16.mxu0 %v836
        %1109 = vmatmul.mubr.bf16.gmra.mxu0 %v643
        %v1110 = vpop.f32.mrf.mxu0
        %v1111 = vadd.f32 0.0, %v1110
        %v1112 = vpop.f32.mrf.mxu0
        %v1113 = vpop.f32.mrf.mxu0
        %v1114 = vadd.f32 0.0, %v1113
        %v1115 = vpop.f32.mrf.mxu0
        %1116 = vmatprep.mubr.bf16.mxu0 %v839
        %1117 = vmatmul.mubr.bf16.gmra.mxu0 %v645
        %v1118 = vpop.f32.mrf.mxu0
        %v1119 = vadd.f32 0.0, %v1118
        %v1120 = vpop.f32.mrf.mxu0
        %v1121 = vpop.f32.mrf.mxu0
        %v1122 = vadd.f32 0.0, %v1121
        %v1123 = vpop.f32.mrf.mxu0
        %1124 = vmatprep.mubr.bf16.mxu0 %v842
        %1125 = vmatmul.mubr.bf16.gmra.mxu0 %v647
        %v1126 = vpop.f32.mrf.mxu0
        %v1127 = vadd.f32 0.0, %v1126
        %v1128 = vpop.f32.mrf.mxu0
        %v1129 = vpop.f32.mrf.mxu0
        %v1130 = vadd.f32 0.0, %v1129
        %v1131 = vpop.f32.mrf.mxu0
        %1132 = vmatprep.mubr.bf16.mxu0 %v845
        %1133 = vmatmul.mubr.bf16.gmra.mxu0 %v649
        %v1134 = vpop.f32.mrf.mxu0
        %v1135 = vadd.f32 0.0, %v1134
        %v1136 = vpop.f32.mrf.mxu0
        %v1137 = vpop.f32.mrf.mxu0
        %v1138 = vadd.f32 0.0, %v1137
        %v1139 = vpop.f32.mrf.mxu0
        %1140 = vmatprep.mubr.bf16.mxu0 %v848
        %1141 = vmatmul.mubr.bf16.gmra.mxu0 %v651
        %v1142 = vpop.f32.mrf.mxu0
        %v1143 = vadd.f32 0.0, %v1142
        %v1144 = vpop.f32.mrf.mxu0
        %v1145 = vpop.f32.mrf.mxu0
        %v1146 = vadd.f32 0.0, %v1145
        %v1147 = vpop.f32.mrf.mxu0
        %1148 = vmatprep.mubr.bf16.mxu0 %v851
        %1149 = vmatmul.mubr.bf16.gmra.mxu0 %v653
        %v1150 = vpop.f32.mrf.mxu0
        %v1151 = vadd.f32 0.0, %v1150
        %v1152 = vpop.f32.mrf.mxu0
        %v1153 = vpop.f32.mrf.mxu0
        %v1154 = vadd.f32 0.0, %v1153
        %v1155 = vpop.f32.mrf.mxu0
        %1156 = vmatprep.mubr.bf16.mxu0 %v854
        %1157 = vmatmul.mubr.bf16.gmra.mxu0 %v655
        %v1158 = vpop.f32.mrf.mxu0
        %v1159 = vadd.f32 0.0, %v1158
        %v1160 = vpop.f32.mrf.mxu0
        %v1161 = vpop.f32.mrf.mxu0
        %v1162 = vadd.f32 0.0, %v1161
        %v1163 = vpop.f32.mrf.mxu0
        %1164 = vmatprep.mubr.bf16.mxu0 %v857
        %1165 = vmatmul.mubr.bf16.gmra.mxu0 %v657
        %v1166 = vpop.f32.mrf.mxu0
        %v1167 = vadd.f32 0.0, %v1166
        %v1168 = vpop.f32.mrf.mxu0
        %v1169 = vpop.f32.mrf.mxu0
        %v1170 = vadd.f32 0.0, %v1169
        %v1171 = vpop.f32.mrf.mxu0
        %1172 = vmatprep.mubr.bf16.mxu0 %v860
        %1173 = vmatmul.mubr.bf16.gmra.mxu0 %v659
        %v1174 = vpop.f32.mrf.mxu0
        %v1175 = vadd.f32 0.0, %v1174
        %v1176 = vpop.f32.mrf.mxu0
        %v1177 = vpop.f32.mrf.mxu0
        %v1178 = vadd.f32 0.0, %v1177
        %v1179 = vpop.f32.mrf.mxu0
        %1180 = vmatprep.mubr.bf16.mxu0 %v863
        %1181 = vmatmul.mubr.bf16.gmra.mxu0 %v661
        %v1182 = vpop.f32.mrf.mxu0
        %v1183 = vadd.f32 0.0, %v1182
        %v1184 = vpop.f32.mrf.mxu0
        %v1185 = vpop.f32.mrf.mxu0
        %v1186 = vadd.f32 0.0, %v1185
        %v1187 = vpop.f32.mrf.mxu0
        %1188 = vmatprep.mubr.bf16.mxu0 %v866
        %1189 = vmatmul.mubr.bf16.gmra.mxu0 %v663
        %v1190 = vpop.f32.mrf.mxu0
        %v1191 = vadd.f32 0.0, %v1190
        %v1192 = vpop.f32.mrf.mxu0
        %v1193 = vpop.f32.mrf.mxu0
        %v1194 = vpop.f32.mrf.mxu0
        %1195 = vdwg.mxu0
        %v1196 = vadd.f32 %v903, %v906
        %v1197 = vadd.f32 %v1196, %v911
        %v1198 = vadd.f32 %v1197, %v914
        %v1199 = vadd.f32 %v1198, %v919
        %v1200 = vadd.f32 %v1199, %v922
        %v1201 = vadd.f32 %v1200, %v927
        %v1202 = vadd.f32 %v1201, %v930
        %v1203 = vadd.f32 %v1202, %v935
        %v1204 = vadd.f32 %v1203, %v938
        %v1205 = vadd.f32 %v1204, %v943
        %v1206 = vadd.f32 %v1205, %v946
        %v1207 = vadd.f32 %v1206, %v951
        %v1208 = vadd.f32 %v1207, %v954
        %v1209 = vadd.f32 %v1208, %v959
        %v1210 = vadd.f32 %v1209, %v962
        %v1211 = vadd.f32 %v1210, %v967
        %v1212 = vadd.f32 %v1211, %v970
        %v1213 = vadd.f32 %v1212, %v975
        %v1214 = vadd.f32 %v1213, %v978
        %v1215 = vadd.f32 %v1214, %v983
        %v1216 = vadd.f32 %v1215, %v986
        %v1217 = vadd.f32 %v1216, %v991
        %v1218 = vadd.f32 %v1217, %v994
        %v1219 = vadd.f32 %v1218, %v999
        %v1220 = vadd.f32 %v1219, %v1002
        %v1221 = vadd.f32 %v1220, %v1007
        %v1222 = vadd.f32 %v1221, %v1010
        %v1223 = vadd.f32 %v1222, %v1015
        %v1224 = vadd.f32 %v1223, %v1018
        %v1225 = vadd.f32 %v1224, %v1023
        %v1226 = vadd.f32 %v1225, %v1026
        %v1227 = vadd.f32 %v1226, %v1031
        %v1228 = vadd.f32 %v1227, %v1034
        %v1229 = vadd.f32 %v1228, %v1039
        %v1230 = vadd.f32 %v1229, %v1042
        %v1231 = vadd.f32 %v1230, %v1047
        %v1232 = vadd.f32 %v1231, %v1050
        %v1233 = vadd.f32 %v1232, %v1055
        %v1234 = vadd.f32 %v1233, %v1058
        %v1235 = vadd.f32 %v1234, %v1063
        %v1236 = vadd.f32 %v1235, %v1066
        %v1237 = vadd.f32 %v1236, %v1071
        %v1238 = vadd.f32 %v1237, %v1074
        %v1239 = vadd.f32 %v1238, %v1079
        %v1240 = vadd.f32 %v1239, %v1082
        %v1241 = vadd.f32 %v1240, %v1087
        %v1242 = vadd.f32 %v1241, %v1090
        %v1243 = vadd.f32 %v1242, %v1095
        %v1244 = vadd.f32 %v1243, %v1098
        %v1245 = vadd.f32 %v1244, %v1103
        %v1246 = vadd.f32 %v1245, %v1106
        %v1247 = vadd.f32 %v1246, %v1111
        %v1248 = vadd.f32 %v1247, %v1114
        %v1249 = vadd.f32 %v1248, %v1119
        %v1250 = vadd.f32 %v1249, %v1122
        %v1251 = vadd.f32 %v1250, %v1127
        %v1252 = vadd.f32 %v1251, %v1130
        %v1253 = vadd.f32 %v1252, %v1135
        %v1254 = vadd.f32 %v1253, %v1138
        %v1255 = vadd.f32 %v1254, %v1143
        %v1256 = vadd.f32 %v1255, %v1146
        %v1257 = vadd.f32 %v1256, %v1151
        %v1258 = vadd.f32 %v1257, %v1154
        %v1259 = vadd.f32 %v1258, %v1159
        %v1260 = vadd.f32 %v1259, %v1162
        %v1261 = vadd.f32 %v1260, %v1167
        %v1262 = vadd.f32 %v1261, %v1170
        %v1263 = vadd.f32 %v1262, %v1175
        %v1264 = vadd.f32 %v1263, %v1178
        %v1265 = vadd.f32 %v1264, %v1183
        %v1266 = vadd.f32 %v1265, %v1186
        %v1267 = vadd.f32 %v1266, %v1191
        %v1268 = vrot.slane %v1267, 4
        %v1269 = vadd.f32 %v1267, %v1268
        %v1270 = vrot.slane %v1269, 2
        %v1271 = vadd.f32 %v1269, %v1270
        %v1272 = vrot.slane %v1271, 1
        %v1273 = vadd.f32 %v1271, %v1272
        %v1274 = vmul.f32 %v903, %v903
        %v1275 = vmul.f32 %v906, %v906
        %v1276 = vmul.f32 %v911, %v911
        %v1277 = vmul.f32 %v914, %v914
        %v1278 = vmul.f32 %v919, %v919
        %v1279 = vmul.f32 %v922, %v922
        %v1280 = vmul.f32 %v927, %v927
        %v1281 = vmul.f32 %v930, %v930
        %v1282 = vmul.f32 %v935, %v935
        %v1283 = vmul.f32 %v938, %v938
        %v1284 = vmul.f32 %v943, %v943
        %v1285 = vmul.f32 %v946, %v946
        %v1286 = vmul.f32 %v951, %v951
        %v1287 = vmul.f32 %v954, %v954
        %v1288 = vmul.f32 %v959, %v959
        %v1289 = vmul.f32 %v962, %v962
        %v1290 = vmul.f32 %v967, %v967
        %v1291 = vmul.f32 %v970, %v970
        %v1292 = vmul.f32 %v975, %v975
        %v1293 = vmul.f32 %v978, %v978
        %v1294 = vmul.f32 %v983, %v983
        %v1295 = vmul.f32 %v986, %v986
        %v1296 = vmul.f32 %v991, %v991
        %v1297 = vmul.f32 %v994, %v994
        %v1298 = vmul.f32 %v999, %v999
        %v1299 = vmul.f32 %v1002, %v1002
        %v1300 = vmul.f32 %v1007, %v1007
        %v1301 = vmul.f32 %v1010, %v1010
        %v1302 = vmul.f32 %v1015, %v1015
        %v1303 = vmul.f32 %v1018, %v1018
        %v1304 = vmul.f32 %v1023, %v1023
        %v1305 = vmul.f32 %v1026, %v1026
        %v1306 = vmul.f32 %v1031, %v1031
        %v1307 = vmul.f32 %v1034, %v1034
        %v1308 = vmul.f32 %v1039, %v1039
        %v1309 = vmul.f32 %v1042, %v1042
        %v1310 = vmul.f32 %v1047, %v1047
        %v1311 = vmul.f32 %v1050, %v1050
        %v1312 = vmul.f32 %v1055, %v1055
        %v1313 = vmul.f32 %v1058, %v1058
        %v1314 = vmul.f32 %v1063, %v1063
        %v1315 = vmul.f32 %v1066, %v1066
        %v1316 = vmul.f32 %v1071, %v1071
        %v1317 = vmul.f32 %v1074, %v1074
        %v1318 = vmul.f32 %v1079, %v1079
        %v1319 = vmul.f32 %v1082, %v1082
        %v1320 = vmul.f32 %v1087, %v1087
        %v1321 = vmul.f32 %v1090, %v1090
        %v1322 = vmul.f32 %v1095, %v1095
        %v1323 = vmul.f32 %v1098, %v1098
        %v1324 = vmul.f32 %v1103, %v1103
        %v1325 = vmul.f32 %v1106, %v1106
        %v1326 = vmul.f32 %v1111, %v1111
        %v1327 = vmul.f32 %v1114, %v1114
        %v1328 = vmul.f32 %v1119, %v1119
        %v1329 = vmul.f32 %v1122, %v1122
        %v1330 = vmul.f32 %v1127, %v1127
        %v1331 = vmul.f32 %v1130, %v1130
        %v1332 = vmul.f32 %v1135, %v1135
        %v1333 = vmul.f32 %v1138, %v1138
        %v1334 = vmul.f32 %v1143, %v1143
        %v1335 = vmul.f32 %v1146, %v1146
        %v1336 = vmul.f32 %v1151, %v1151
        %v1337 = vmul.f32 %v1154, %v1154
        %v1338 = vmul.f32 %v1159, %v1159
        %v1339 = vmul.f32 %v1162, %v1162
        %v1340 = vmul.f32 %v1167, %v1167
        %v1341 = vmul.f32 %v1170, %v1170
        %v1342 = vmul.f32 %v1175, %v1175
        %v1343 = vmul.f32 %v1178, %v1178
        %v1344 = vmul.f32 %v1183, %v1183
        %v1345 = vmul.f32 %v1186, %v1186
        %v1346 = vmul.f32 %v1191, %v1191
        %v1347 = vadd.f32 %v1274, %v1275
        %v1348 = vadd.f32 %v1347, %v1276
        %v1349 = vadd.f32 %v1348, %v1277
        %v1350 = vadd.f32 %v1349, %v1278
        %v1351 = vadd.f32 %v1350, %v1279
        %v1352 = vadd.f32 %v1351, %v1280
        %v1353 = vadd.f32 %v1352, %v1281
        %v1354 = vadd.f32 %v1353, %v1282
        %v1355 = vadd.f32 %v1354, %v1283
        %v1356 = vadd.f32 %v1355, %v1284
        %v1357 = vadd.f32 %v1356, %v1285
        %v1358 = vadd.f32 %v1357, %v1286
        %v1359 = vadd.f32 %v1358, %v1287
        %v1360 = vadd.f32 %v1359, %v1288
        %v1361 = vadd.f32 %v1360, %v1289
        %v1362 = vadd.f32 %v1361, %v1290
        %v1363 = vadd.f32 %v1362, %v1291
        %v1364 = vadd.f32 %v1363, %v1292
        %v1365 = vadd.f32 %v1364, %v1293
        %v1366 = vadd.f32 %v1365, %v1294
        %v1367 = vadd.f32 %v1366, %v1295
        %v1368 = vadd.f32 %v1367, %v1296
        %v1369 = vadd.f32 %v1368, %v1297
        %v1370 = vadd.f32 %v1369, %v1298
        %v1371 = vadd.f32 %v1370, %v1299
        %v1372 = vadd.f32 %v1371, %v1300
        %v1373 = vadd.f32 %v1372, %v1301
        %v1374 = vadd.f32 %v1373, %v1302
        %v1375 = vadd.f32 %v1374, %v1303
        %v1376 = vadd.f32 %v1375, %v1304
        %v1377 = vadd.f32 %v1376, %v1305
        %v1378 = vadd.f32 %v1377, %v1306
        %v1379 = vadd.f32 %v1378, %v1307
        %v1380 = vadd.f32 %v1379, %v1308
        %v1381 = vadd.f32 %v1380, %v1309
        %v1382 = vadd.f32 %v1381, %v1310
        %v1383 = vadd.f32 %v1382, %v1311
        %v1384 = vadd.f32 %v1383, %v1312
        %v1385 = vadd.f32 %v1384, %v1313
        %v1386 = vadd.f32 %v1385, %v1314
        %v1387 = vadd.f32 %v1386, %v1315
        %v1388 = vadd.f32 %v1387, %v1316
        %v1389 = vadd.f32 %v1388, %v1317
        %v1390 = vadd.f32 %v1389, %v1318
        %v1391 = vadd.f32 %v1390, %v1319
        %v1392 = vadd.f32 %v1391, %v1320
        %v1393 = vadd.f32 %v1392, %v1321
        %v1394 = vadd.f32 %v1393, %v1322
        %v1395 = vadd.f32 %v1394, %v1323
        %v1396 = vadd.f32 %v1395, %v1324
        %v1397 = vadd.f32 %v1396, %v1325
        %v1398 = vadd.f32 %v1397, %v1326
        %v1399 = vadd.f32 %v1398, %v1327
        %v1400 = vadd.f32 %v1399, %v1328
        %v1401 = vadd.f32 %v1400, %v1329
        %v1402 = vadd.f32 %v1401, %v1330
        %v1403 = vadd.f32 %v1402, %v1331
        %v1404 = vadd.f32 %v1403, %v1332
        %v1405 = vadd.f32 %v1404, %v1333
        %v1406 = vadd.f32 %v1405, %v1334
        %v1407 = vadd.f32 %v1406, %v1335
        %v1408 = vadd.f32 %v1407, %v1336
        %v1409 = vadd.f32 %v1408, %v1337
        %v1410 = vadd.f32 %v1409, %v1338
        %v1411 = vadd.f32 %v1410, %v1339
        %v1412 = vadd.f32 %v1411, %v1340
        %v1413 = vadd.f32 %v1412, %v1341
        %v1414 = vadd.f32 %v1413, %v1342
        %v1415 = vadd.f32 %v1414, %v1343
        %v1416 = vadd.f32 %v1415, %v1344
        %v1417 = vadd.f32 %v1416, %v1345
        %v1418 = vadd.f32 %v1417, %v1346
        %v1419 = vrot.slane %v1418, 4
        %v1420 = vadd.f32 %v1418, %v1419
        %v1421 = vrot.slane %v1420, 2
        %v1422 = vadd.f32 %v1420, %v1421
        %v1423 = vrot.slane %v1422, 1
        %v1424 = vadd.f32 %v1422, %v1423
        %v1425 = vmul.f32 %v1273, 0.0017301039
        %v1426 = vmul.f32 %v1424, 0.0017301039
        %v1427 = vmul.f32 %v1425, %v1425
        %v1428 = vsub.f32 %v1426, %v1427
        %v1429 = vmax.f32 %v1428, 0.0
        %v1430 = vsub.f32 %v903, %v1425
        %v1431 = vsub.f32 %v906, %v1425
        %v1432 = vsub.f32 %v911, %v1425
        %v1433 = vsub.f32 %v914, %v1425
        %v1434 = vsub.f32 %v919, %v1425
        %v1435 = vsub.f32 %v922, %v1425
        %v1436 = vsub.f32 %v927, %v1425
        %v1437 = vsub.f32 %v930, %v1425
        %v1438 = vsub.f32 %v935, %v1425
        %v1439 = vsub.f32 %v938, %v1425
        %v1440 = vsub.f32 %v943, %v1425
        %v1441 = vsub.f32 %v946, %v1425
        %v1442 = vsub.f32 %v951, %v1425
        %v1443 = vsub.f32 %v954, %v1425
        %v1444 = vsub.f32 %v959, %v1425
        %v1445 = vsub.f32 %v962, %v1425
        %v1446 = vsub.f32 %v967, %v1425
        %v1447 = vsub.f32 %v970, %v1425
        %v1448 = vsub.f32 %v975, %v1425
        %v1449 = vsub.f32 %v978, %v1425
        %v1450 = vsub.f32 %v983, %v1425
        %v1451 = vsub.f32 %v986, %v1425
        %v1452 = vsub.f32 %v991, %v1425
        %v1453 = vsub.f32 %v994, %v1425
        %v1454 = vsub.f32 %v999, %v1425
        %v1455 = vsub.f32 %v1002, %v1425
        %v1456 = vsub.f32 %v1007, %v1425
        %v1457 = vsub.f32 %v1010, %v1425
        %v1458 = vsub.f32 %v1015, %v1425
        %v1459 = vsub.f32 %v1018, %v1425
        %v1460 = vsub.f32 %v1023, %v1425
        %v1461 = vsub.f32 %v1026, %v1425
        %v1462 = vsub.f32 %v1031, %v1425
        %v1463 = vsub.f32 %v1034, %v1425
        %v1464 = vsub.f32 %v1039, %v1425
        %v1465 = vsub.f32 %v1042, %v1425
        %v1466 = vsub.f32 %v1047, %v1425
        %v1467 = vsub.f32 %v1050, %v1425
        %v1468 = vsub.f32 %v1055, %v1425
        %v1469 = vsub.f32 %v1058, %v1425
        %v1470 = vsub.f32 %v1063, %v1425
        %v1471 = vsub.f32 %v1066, %v1425
        %v1472 = vsub.f32 %v1071, %v1425
        %v1473 = vsub.f32 %v1074, %v1425
        %v1474 = vsub.f32 %v1079, %v1425
        %v1475 = vsub.f32 %v1082, %v1425
        %v1476 = vsub.f32 %v1087, %v1425
        %v1477 = vsub.f32 %v1090, %v1425
        %v1478 = vsub.f32 %v1095, %v1425
        %v1479 = vsub.f32 %v1098, %v1425
        %v1480 = vsub.f32 %v1103, %v1425
        %v1481 = vsub.f32 %v1106, %v1425
        %v1482 = vsub.f32 %v1111, %v1425
        %v1483 = vsub.f32 %v1114, %v1425
        %v1484 = vsub.f32 %v1119, %v1425
        %v1485 = vsub.f32 %v1122, %v1425
        %v1486 = vsub.f32 %v1127, %v1425
        %v1487 = vsub.f32 %v1130, %v1425
        %v1488 = vsub.f32 %v1135, %v1425
        %v1489 = vsub.f32 %v1138, %v1425
        %v1490 = vsub.f32 %v1143, %v1425
        %v1491 = vsub.f32 %v1146, %v1425
        %v1492 = vsub.f32 %v1151, %v1425
        %v1493 = vsub.f32 %v1154, %v1425
        %v1494 = vsub.f32 %v1159, %v1425
        %v1495 = vsub.f32 %v1162, %v1425
        %v1496 = vsub.f32 %v1167, %v1425
        %v1497 = vsub.f32 %v1170, %v1425
        %v1498 = vsub.f32 %v1175, %v1425
        %v1499 = vsub.f32 %v1178, %v1425
        %v1500 = vsub.f32 %v1183, %v1425
        %v1501 = vsub.f32 %v1186, %v1425
        %v1502 = vsub.f32 %v1191, %v1425
        %v1503 = vadd.f32 %v1429, 0.001
        %v1504 = vrsqrt.pop %v1503
        %v1505 = vmul.f32 %v1430, %v1504
        %v1506 = vmul.f32 %v1431, %v1504
        %v1507 = vmul.f32 %v1432, %v1504
        %v1508 = vmul.f32 %v1433, %v1504
        %v1509 = vmul.f32 %v1434, %v1504
        %v1510 = vmul.f32 %v1435, %v1504
        %v1511 = vmul.f32 %v1436, %v1504
        %v1512 = vmul.f32 %v1437, %v1504
        %v1513 = vmul.f32 %v1438, %v1504
        %v1514 = vmul.f32 %v1439, %v1504
        %v1515 = vmul.f32 %v1440, %v1504
        %v1516 = vmul.f32 %v1441, %v1504
        %v1517 = vmul.f32 %v1442, %v1504
        %v1518 = vmul.f32 %v1443, %v1504
        %v1519 = vmul.f32 %v1444, %v1504
        %v1520 = vmul.f32 %v1445, %v1504
        %v1521 = vmul.f32 %v1446, %v1504
        %v1522 = vmul.f32 %v1447, %v1504
        %v1523 = vmul.f32 %v1448, %v1504
        %v1524 = vmul.f32 %v1449, %v1504
        %v1525 = vmul.f32 %v1450, %v1504
        %v1526 = vmul.f32 %v1451, %v1504
        %v1527 = vmul.f32 %v1452, %v1504
        %v1528 = vmul.f32 %v1453, %v1504
        %v1529 = vmul.f32 %v1454, %v1504
        %v1530 = vmul.f32 %v1455, %v1504
        %v1531 = vmul.f32 %v1456, %v1504
        %v1532 = vmul.f32 %v1457, %v1504
        %v1533 = vmul.f32 %v1458, %v1504
        %v1534 = vmul.f32 %v1459, %v1504
        %v1535 = vmul.f32 %v1460, %v1504
        %v1536 = vmul.f32 %v1461, %v1504
        %v1537 = vmul.f32 %v1462, %v1504
        %v1538 = vmul.f32 %v1463, %v1504
        %v1539 = vmul.f32 %v1464, %v1504
        %v1540 = vmul.f32 %v1465, %v1504
        %v1541 = vmul.f32 %v1466, %v1504
        %v1542 = vmul.f32 %v1467, %v1504
        %v1543 = vmul.f32 %v1468, %v1504
        %v1544 = vmul.f32 %v1469, %v1504
        %v1545 = vmul.f32 %v1470, %v1504
        %v1546 = vmul.f32 %v1471, %v1504
        %v1547 = vmul.f32 %v1472, %v1504
        %v1548 = vmul.f32 %v1473, %v1504
        %v1549 = vmul.f32 %v1474, %v1504
        %v1550 = vmul.f32 %v1475, %v1504
        %v1551 = vmul.f32 %v1476, %v1504
        %v1552 = vmul.f32 %v1477, %v1504
        %v1553 = vmul.f32 %v1478, %v1504
        %v1554 = vmul.f32 %v1479, %v1504
        %v1555 = vmul.f32 %v1480, %v1504
        %v1556 = vmul.f32 %v1481, %v1504
        %v1557 = vmul.f32 %v1482, %v1504
        %v1558 = vmul.f32 %v1483, %v1504
        %v1559 = vmul.f32 %v1484, %v1504
        %v1560 = vmul.f32 %v1485, %v1504
        %v1561 = vmul.f32 %v1486, %v1504
        %v1562 = vmul.f32 %v1487, %v1504
        %v1563 = vmul.f32 %v1488, %v1504
        %v1564 = vmul.f32 %v1489, %v1504
        %v1565 = vmul.f32 %v1490, %v1504
        %v1566 = vmul.f32 %v1491, %v1504
        %v1567 = vmul.f32 %v1492, %v1504
        %v1568 = vmul.f32 %v1493, %v1504
        %v1569 = vmul.f32 %v1494, %v1504
        %v1570 = vmul.f32 %v1495, %v1504
        %v1571 = vmul.f32 %v1496, %v1504
        %v1572 = vmul.f32 %v1497, %v1504
        %v1573 = vmul.f32 %v1498, %v1504
        %v1574 = vmul.f32 %v1499, %v1504
        %v1575 = vmul.f32 %v1500, %v1504
        %v1576 = vmul.f32 %v1501, %v1504
        %v1577 = vmul.f32 %v1502, %v1504
        %v1578 = vld [vmem:[%s239] sm:$0x1]
        %v1580 = vlaneseq
        %v1581 = vshrl.u32 %v1580, 7
        %v1582 = vsub.s32 0, %v1581
        %v1583 = vrot.slane %v1578, %v1582
        %v1585 = vmul.f32 %v1505, %v1583
        %v1586 = vmul.f32 %v1506, %v1583
        %v1587 = vmul.f32 %v1507, %v1583
        %v1588 = vmul.f32 %v1508, %v1583
        %v1589 = vmul.f32 %v1509, %v1583
        %v1590 = vmul.f32 %v1510, %v1583
        %v1591 = vmul.f32 %v1511, %v1583
        %v1592 = vmul.f32 %v1512, %v1583
        %v1593 = vmul.f32 %v1513, %v1583
        %v1594 = vmul.f32 %v1514, %v1583
        %v1595 = vmul.f32 %v1515, %v1583
        %v1596 = vmul.f32 %v1516, %v1583
        %v1597 = vmul.f32 %v1517, %v1583
        %v1598 = vmul.f32 %v1518, %v1583
        %v1599 = vmul.f32 %v1519, %v1583
        %v1600 = vmul.f32 %v1520, %v1583
        %v1601 = vmul.f32 %v1521, %v1583
        %v1602 = vmul.f32 %v1522, %v1583
        %v1603 = vmul.f32 %v1523, %v1583
        %v1604 = vmul.f32 %v1524, %v1583
        %v1605 = vmul.f32 %v1525, %v1583
        %v1606 = vmul.f32 %v1526, %v1583
        %v1607 = vmul.f32 %v1527, %v1583
        %v1608 = vmul.f32 %v1528, %v1583
        %v1609 = vmul.f32 %v1529, %v1583
        %v1610 = vmul.f32 %v1530, %v1583
        %v1611 = vmul.f32 %v1531, %v1583
        %v1612 = vmul.f32 %v1532, %v1583
        %v1613 = vmul.f32 %v1533, %v1583
        %v1614 = vmul.f32 %v1534, %v1583
        %v1615 = vmul.f32 %v1535, %v1583
        %v1616 = vmul.f32 %v1536, %v1583
        %v1617 = vmul.f32 %v1537, %v1583
        %v1618 = vmul.f32 %v1538, %v1583
        %v1619 = vmul.f32 %v1539, %v1583
        %v1620 = vmul.f32 %v1540, %v1583
        %v1621 = vmul.f32 %v1541, %v1583
        %v1622 = vmul.f32 %v1542, %v1583
        %v1623 = vmul.f32 %v1543, %v1583
        %v1624 = vmul.f32 %v1544, %v1583
        %v1625 = vmul.f32 %v1545, %v1583
        %v1626 = vmul.f32 %v1546, %v1583
        %v1627 = vmul.f32 %v1547, %v1583
        %v1628 = vmul.f32 %v1548, %v1583
        %v1629 = vmul.f32 %v1549, %v1583
        %v1630 = vmul.f32 %v1550, %v1583
        %v1631 = vmul.f32 %v1551, %v1583
        %v1632 = vmul.f32 %v1552, %v1583
        %v1633 = vmul.f32 %v1553, %v1583
        %v1634 = vmul.f32 %v1554, %v1583
        %v1635 = vmul.f32 %v1555, %v1583
        %v1636 = vmul.f32 %v1556, %v1583
        %v1637 = vmul.f32 %v1557, %v1583
        %v1638 = vmul.f32 %v1558, %v1583
        %v1639 = vmul.f32 %v1559, %v1583
        %v1640 = vmul.f32 %v1560, %v1583
        %v1641 = vmul.f32 %v1561, %v1583
        %v1642 = vmul.f32 %v1562, %v1583
        %v1643 = vmul.f32 %v1563, %v1583
        %v1644 = vmul.f32 %v1564, %v1583
        %v1645 = vmul.f32 %v1565, %v1583
        %v1646 = vmul.f32 %v1566, %v1583
        %v1647 = vmul.f32 %v1567, %v1583
        %v1648 = vmul.f32 %v1568, %v1583
        %v1649 = vmul.f32 %v1569, %v1583
        %v1650 = vmul.f32 %v1570, %v1583
        %v1651 = vmul.f32 %v1571, %v1583
        %v1652 = vmul.f32 %v1572, %v1583
        %v1653 = vmul.f32 %v1573, %v1583
        %v1654 = vmul.f32 %v1574, %v1583
        %v1655 = vmul.f32 %v1575, %v1583
        %v1656 = vmul.f32 %v1576, %v1583
        %v1657 = vmul.f32 %v1577, %v1583
        %v1658 = vld [vmem:[%s247] sm:$0x1]
        %v1660 = vlaneseq
        %v1661 = vshrl.u32 %v1660, 7
        %v1662 = vsub.s32 0, %v1661
        %v1663 = vrot.slane %v1658, %v1662
        %v1665 = vadd.f32 %v1585, %v1663
        %v1666 = vadd.f32 %v1586, %v1663
        %v1667 = vadd.f32 %v1587, %v1663
        %v1668 = vadd.f32 %v1588, %v1663
        %v1669 = vadd.f32 %v1589, %v1663
        %v1670 = vadd.f32 %v1590, %v1663
        %v1671 = vadd.f32 %v1591, %v1663
        %v1672 = vadd.f32 %v1592, %v1663
        %v1673 = vadd.f32 %v1593, %v1663
        %v1674 = vadd.f32 %v1594, %v1663
        %v1675 = vadd.f32 %v1595, %v1663
        %v1676 = vadd.f32 %v1596, %v1663
        %v1677 = vadd.f32 %v1597, %v1663
        %v1678 = vadd.f32 %v1598, %v1663
        %v1679 = vadd.f32 %v1599, %v1663
        %v1680 = vadd.f32 %v1600, %v1663
        %v1681 = vadd.f32 %v1601, %v1663
        %v1682 = vadd.f32 %v1602, %v1663
        %v1683 = vadd.f32 %v1603, %v1663
        %v1684 = vadd.f32 %v1604, %v1663
        %v1685 = vadd.f32 %v1605, %v1663
        %v1686 = vadd.f32 %v1606, %v1663
        %v1687 = vadd.f32 %v1607, %v1663
        %v1688 = vadd.f32 %v1608, %v1663
        %v1689 = vadd.f32 %v1609, %v1663
        %v1690 = vadd.f32 %v1610, %v1663
        %v1691 = vadd.f32 %v1611, %v1663
        %v1692 = vadd.f32 %v1612, %v1663
        %v1693 = vadd.f32 %v1613, %v1663
        %v1694 = vadd.f32 %v1614, %v1663
        %v1695 = vadd.f32 %v1615, %v1663
        %v1696 = vadd.f32 %v1616, %v1663
        %v1697 = vadd.f32 %v1617, %v1663
        %v1698 = vadd.f32 %v1618, %v1663
        %v1699 = vadd.f32 %v1619, %v1663
        %v1700 = vadd.f32 %v1620, %v1663
        %v1701 = vadd.f32 %v1621, %v1663
        %v1702 = vadd.f32 %v1622, %v1663
        %v1703 = vadd.f32 %v1623, %v1663
        %v1704 = vadd.f32 %v1624, %v1663
        %v1705 = vadd.f32 %v1625, %v1663
        %v1706 = vadd.f32 %v1626, %v1663
        %v1707 = vadd.f32 %v1627, %v1663
        %v1708 = vadd.f32 %v1628, %v1663
        %v1709 = vadd.f32 %v1629, %v1663
        %v1710 = vadd.f32 %v1630, %v1663
        %v1711 = vadd.f32 %v1631, %v1663
        %v1712 = vadd.f32 %v1632, %v1663
        %v1713 = vadd.f32 %v1633, %v1663
        %v1714 = vadd.f32 %v1634, %v1663
        %v1715 = vadd.f32 %v1635, %v1663
        %v1716 = vadd.f32 %v1636, %v1663
        %v1717 = vadd.f32 %v1637, %v1663
        %v1718 = vadd.f32 %v1638, %v1663
        %v1719 = vadd.f32 %v1639, %v1663
        %v1720 = vadd.f32 %v1640, %v1663
        %v1721 = vadd.f32 %v1641, %v1663
        %v1722 = vadd.f32 %v1642, %v1663
        %v1723 = vadd.f32 %v1643, %v1663
        %v1724 = vadd.f32 %v1644, %v1663
        %v1725 = vadd.f32 %v1645, %v1663
        %v1726 = vadd.f32 %v1646, %v1663
        %v1727 = vadd.f32 %v1647, %v1663
        %v1728 = vadd.f32 %v1648, %v1663
        %v1729 = vadd.f32 %v1649, %v1663
        %v1730 = vadd.f32 %v1650, %v1663
        %v1731 = vadd.f32 %v1651, %v1663
        %v1732 = vadd.f32 %v1652, %v1663
        %v1733 = vadd.f32 %v1653, %v1663
        %v1734 = vadd.f32 %v1654, %v1663
        %v1735 = vadd.f32 %v1655, %v1663
        %v1736 = vadd.f32 %v1656, %v1663
        %v1737 = vadd.f32 %v1657, %v1663
        %v1738 = vmax.f32 %v1665, 0.0
        %v1739 = vmax.f32 %v1666, 0.0
        %v1740 = vmax.f32 %v1667, 0.0
        %v1741 = vmax.f32 %v1668, 0.0
        %v1742 = vmax.f32 %v1669, 0.0
        %v1743 = vmax.f32 %v1670, 0.0
        %v1744 = vmax.f32 %v1671, 0.0
        %v1745 = vmax.f32 %v1672, 0.0
        %v1746 = vmax.f32 %v1673, 0.0
        %v1747 = vmax.f32 %v1674, 0.0
        %v1748 = vmax.f32 %v1675, 0.0
        %v1749 = vmax.f32 %v1676, 0.0
        %v1750 = vmax.f32 %v1677, 0.0
        %v1751 = vmax.f32 %v1678, 0.0
        %v1752 = vmax.f32 %v1679, 0.0
        %v1753 = vmax.f32 %v1680, 0.0
        %v1754 = vmax.f32 %v1681, 0.0
        %v1755 = vmax.f32 %v1682, 0.0
        %v1756 = vmax.f32 %v1683, 0.0
        %v1757 = vmax.f32 %v1684, 0.0
        %v1758 = vmax.f32 %v1685, 0.0
        %v1759 = vmax.f32 %v1686, 0.0
        %v1760 = vmax.f32 %v1687, 0.0
        %v1761 = vmax.f32 %v1688, 0.0
        %v1762 = vmax.f32 %v1689, 0.0
        %v1763 = vmax.f32 %v1690, 0.0
        %v1764 = vmax.f32 %v1691, 0.0
        %v1765 = vmax.f32 %v1692, 0.0
        %v1766 = vmax.f32 %v1693, 0.0
        %v1767 = vmax.f32 %v1694, 0.0
        %v1768 = vmax.f32 %v1695, 0.0
        %v1769 = vmax.f32 %v1696, 0.0
        %v1770 = vmax.f32 %v1697, 0.0
        %v1771 = vmax.f32 %v1698, 0.0
        %v1772 = vmax.f32 %v1699, 0.0
        %v1773 = vmax.f32 %v1700, 0.0
        %v1774 = vmax.f32 %v1701, 0.0
        %v1775 = vmax.f32 %v1702, 0.0
        %v1776 = vmax.f32 %v1703, 0.0
        %v1777 = vmax.f32 %v1704, 0.0
        %v1778 = vmax.f32 %v1705, 0.0
        %v1779 = vmax.f32 %v1706, 0.0
        %v1780 = vmax.f32 %v1707, 0.0
        %v1781 = vmax.f32 %v1708, 0.0
        %v1782 = vmax.f32 %v1709, 0.0
        %v1783 = vmax.f32 %v1710, 0.0
        %v1784 = vmax.f32 %v1711, 0.0
        %v1785 = vmax.f32 %v1712, 0.0
        %v1786 = vmax.f32 %v1713, 0.0
        %v1787 = vmax.f32 %v1714, 0.0
        %v1788 = vmax.f32 %v1715, 0.0
        %v1789 = vmax.f32 %v1716, 0.0
        %v1790 = vmax.f32 %v1717, 0.0
        %v1791 = vmax.f32 %v1718, 0.0
        %v1792 = vmax.f32 %v1719, 0.0
        %v1793 = vmax.f32 %v1720, 0.0
        %v1794 = vmax.f32 %v1721, 0.0
        %v1795 = vmax.f32 %v1722, 0.0
        %v1796 = vmax.f32 %v1723, 0.0
        %v1797 = vmax.f32 %v1724, 0.0
        %v1798 = vmax.f32 %v1725, 0.0
        %v1799 = vmax.f32 %v1726, 0.0
        %v1800 = vmax.f32 %v1727, 0.0
        %v1801 = vmax.f32 %v1728, 0.0
        %v1802 = vmax.f32 %v1729, 0.0
        %v1803 = vmax.f32 %v1730, 0.0
        %v1804 = vmax.f32 %v1731, 0.0
        %v1805 = vmax.f32 %v1732, 0.0
        %v1806 = vmax.f32 %v1733, 0.0
        %v1807 = vmax.f32 %v1734, 0.0
        %v1808 = vmax.f32 %v1735, 0.0
        %v1809 = vmax.f32 %v1736, 0.0
        %v1810 = vmax.f32 %v1737, 0.0
        %1811 = vst [vmem:[%s279] sm:$0xff] %v1738
        %1812 = vst [vmem:[%s279 + $0x8] sm:$0xff] %v1739
        %1813 = vst [vmem:[%s279 + $0x10] sm:$0xff] %v1740
        %1814 = vst [vmem:[%s279 + $0x18] sm:$0xff] %v1741
        %1815 = vst [vmem:[%s279 + $0x20] sm:$0xff] %v1742
        %1816 = vst [vmem:[%s279 + $0x28] sm:$0xff] %v1743
        %1817 = vst [vmem:[%s279 + $0x30] sm:$0xff] %v1744
        %1818 = vst [vmem:[%s279 + $0x38] sm:$0xff] %v1745
        %1819 = vst [vmem:[%s279 + $0x40] sm:$0xff] %v1746
        %1820 = vst [vmem:[%s279 + $0x48] sm:$0xff] %v1747
        %1821 = vst [vmem:[%s279 + $0x50] sm:$0xff] %v1748
        %1822 = vst [vmem:[%s279 + $0x58] sm:$0xff] %v1749
        %1823 = vst [vmem:[%s279 + $0x60] sm:$0xff] %v1750
        %1824 = vst [vmem:[%s279 + $0x68] sm:$0xff] %v1751
        %1825 = vst [vmem:[%s279 + $0x70] sm:$0xff] %v1752
        %1826 = vst [vmem:[%s279 + $0x78] sm:$0xff] %v1753
        %1827 = vst [vmem:[%s279 + $0x80] sm:$0xff] %v1754
        %1828 = vst [vmem:[%s279 + $0x88] sm:$0xff] %v1755
        %1829 = vst [vmem:[%s279 + $0x90] sm:$0xff] %v1756
        %1830 = vst [vmem:[%s279 + $0x98] sm:$0xff] %v1757
        %1831 = vst [vmem:[%s279 + $0xa0] sm:$0xff] %v1758
        %1832 = vst [vmem:[%s279 + $0xa8] sm:$0xff] %v1759
        %1833 = vst [vmem:[%s279 + $0xb0] sm:$0xff] %v1760
        %1834 = vst [vmem:[%s279 + $0xb8] sm:$0xff] %v1761
        %1835 = vst [vmem:[%s279 + $0xc0] sm:$0xff] %v1762
        %1836 = vst [vmem:[%s279 + $0xc8] sm:$0xff] %v1763
        %1837 = vst [vmem:[%s279 + $0xd0] sm:$0xff] %v1764
        %1838 = vst [vmem:[%s279 + $0xd8] sm:$0xff] %v1765
        %1839 = vst [vmem:[%s279 + $0xe0] sm:$0xff] %v1766
        %1840 = vst [vmem:[%s279 + $0xe8] sm:$0xff] %v1767
        %1841 = vst [vmem:[%s279 + $0xf0] sm:$0xff] %v1768
        %1842 = vst [vmem:[%s279 + $0xf8] sm:$0xff] %v1769
        %1843 = vst [vmem:[%s279 + $0x100] sm:$0xff] %v1770
        %1844 = vst [vmem:[%s279 + $0x108] sm:$0xff] %v1771
        %1845 = vst [vmem:[%s279 + $0x110] sm:$0xff] %v1772
        %1846 = vst [vmem:[%s279 + $0x118] sm:$0xff] %v1773
        %1847 = vst [vmem:[%s279 + $0x120] sm:$0xff] %v1774
        %1848 = vst [vmem:[%s279 + $0x128] sm:$0xff] %v1775
        %1849 = vst [vmem:[%s279 + $0x130] sm:$0xff] %v1776
        %1850 = vst [vmem:[%s279 + $0x138] sm:$0xff] %v1777
        %1851 = vst [vmem:[%s279 + $0x140] sm:$0xff] %v1778
        %1852 = vst [vmem:[%s279 + $0x148] sm:$0xff] %v1779
        %1853 = vst [vmem:[%s279 + $0x150] sm:$0xff] %v1780
        %1854 = vst [vmem:[%s279 + $0x158] sm:$0xff] %v1781
        %1855 = vst [vmem:[%s279 + $0x160] sm:$0xff] %v1782
        %1856 = vst [vmem:[%s279 + $0x168] sm:$0xff] %v1783
        %1857 = vst [vmem:[%s279 + $0x170] sm:$0xff] %v1784
        %1858 = vst [vmem:[%s279 + $0x178] sm:$0xff] %v1785
        %1859 = vst [vmem:[%s279 + $0x180] sm:$0xff] %v1786
        %1860 = vst [vmem:[%s279 + $0x188] sm:$0xff] %v1787
        %1861 = vst [vmem:[%s279 + $0x190] sm:$0xff] %v1788
        %1862 = vst [vmem:[%s279 + $0x198] sm:$0xff] %v1789
        %1863 = vst [vmem:[%s279 + $0x1a0] sm:$0xff] %v1790
        %1864 = vst [vmem:[%s279 + $0x1a8] sm:$0xff] %v1791
        %1865 = vst [vmem:[%s279 + $0x1b0] sm:$0xff] %v1792
        %1866 = vst [vmem:[%s279 + $0x1b8] sm:$0xff] %v1793
        %1867 = vst [vmem:[%s279 + $0x1c0] sm:$0xff] %v1794
        %1868 = vst [vmem:[%s279 + $0x1c8] sm:$0xff] %v1795
        %1869 = vst [vmem:[%s279 + $0x1d0] sm:$0xff] %v1796
        %1870 = vst [vmem:[%s279 + $0x1d8] sm:$0xff] %v1797
        %1871 = vst [vmem:[%s279 + $0x1e0] sm:$0xff] %v1798
        %1872 = vst [vmem:[%s279 + $0x1e8] sm:$0xff] %v1799
        %1873 = vst [vmem:[%s279 + $0x1f0] sm:$0xff] %v1800
        %1874 = vst [vmem:[%s279 + $0x1f8] sm:$0xff] %v1801
        %1875 = vst [vmem:[%s279 + $0x200] sm:$0xff] %v1802
        %1876 = vst [vmem:[%s279 + $0x208] sm:$0xff] %v1803
        %1877 = vst [vmem:[%s279 + $0x210] sm:$0xff] %v1804
        %1878 = vst [vmem:[%s279 + $0x218] sm:$0xff] %v1805
        %1879 = vst [vmem:[%s279 + $0x220] sm:$0xff] %v1806
        %1880 = vst [vmem:[%s279 + $0x228] sm:$0xff] %v1807
        %1881 = vst [vmem:[%s279 + $0x230] sm:$0xff] %v1808
        %1882 = vst [vmem:[%s279 + $0x238] sm:$0xff] %v1809
        %1883 = vst [vmem:[%s279 + $0x240] sm:$0xff] %v1810
        %s1884 = sand.u32 %s131, 1
        %s1885 = scalar_lea.sflag [#allocation4], %s1884
        %s1886 = sand.u32 %s131, 1
        %s1887 = smul.addr %s1886, 584
        %s1888 = scalar_lea.vmem [#allocation8], %s1887
        // Predicated region
        $region49: #{tpu_custom_call.1} parent=35 // pred_check
          %p1889 = pneg %p141
        $region50: #{tpu_custom_call.1} parent=35 // pred_check_branch
          %1891 = sbr.rel (%p1889) target = $region52
        $region51: #{tpu_custom_call.1} parent=35 // pred_region
          %s1893 = ssub.s32 9344, 9344
          %1894 = vsyncadd %s1885, %s1893
          %s1895 = smul.addr %s24, 128
          %s1896 = scalar_lea.hbm %s4, %s1895
          %s1897 = sshll.u32 %s1888, 4
          %s1898 = int_to_ptr.vmem [resolvable:$true] %s1897
          %1903 = dma.vmem_to_hbm [thread:$0]  %s1898, 9344, %s1896, %s1885, 128, 512, 8
        $region52: #{tpu_custom_call.1} parent=35 // pred_fallthru
          _
      $region36: #{tpu_custom_call.1} parent=5 // pred_fallthru
        _
      %p1904 = scmp.le.s32.totalorder 2, %s19
      // Predicated region
      $region53: #{tpu_custom_call.1} parent=5 // pred_check
        %p1905 = pneg %p1904
      $region54: #{tpu_custom_call.1} parent=5 // pred_check_branch
        %1907 = sbr.rel (%p1905) target = $region56
      $region55: #{tpu_custom_call.1} parent=5 // pred_region
        %s1908 = ssub.s32 %s19, 2
        // Predicated region
        $region57: #{tpu_custom_call.1} parent=55 // pred_check
          %p1909 = pneg %p147
        $region58: #{tpu_custom_call.1} parent=55 // pred_check_branch
          %1911 = sbr.rel (%p1909) target = $region60
        $region59: #{tpu_custom_call.1} parent=55 // pred_region
          %s1912 = sand.u32 %s132, 1
          %s1913 = scalar_lea.sflag [#allocation4], %s1912
          %s1914 = sand.u32 %s132, 1
          %s1915 = smul.addr %s1914, 584
          %s1916 = scalar_lea.vmem [#allocation8], %s1915
          %1917 = dma.done %s1913, 9344
        $region60: #{tpu_custom_call.1} parent=55 // pred_fallthru
          _
      $region56: #{tpu_custom_call.1} parent=5 // pred_fallthru
        _
    $region6: #{tpu_custom_call.1} parent=1 // loop_footer
      %s23 = sadd.s32 1, %s19
    $region7: #{tpu_custom_call.1} parent=1 // loop_footer_branch
      %18 = sbr.rel target = $region3
    $region8: #{tpu_custom_call.1} parent=1 // loop_exit
      _
    %1918 = vsyncpa [#allocation3], 1
    %s1919 = scalar_lea.sflag [#allocation3], 1
    %1920 = vsyncpa %s1919, 1
    %1921 = vsyncpa [#allocation6], 1
    %s1922 = scalar_lea.sflag [#allocation6], 1
    %1923 = vsyncpa %s1922, 1
    %1924 = vsyncpa [#allocation4], 1
    %s1925 = scalar_lea.sflag [#allocation4], 1
    %1926 = vsyncpa %s1925, 1

</llo_original>
